<compile_context>
chip_gen: v6e
topology: v6e:2x2x1
jax: 0.10.0
libtpu: 0.0.40
codegen_flags: <defaults>
</compile_context>

<pallas_src>
import functools

import jax
import jax.numpy as jnp
from jax.experimental import pallas as pl
from jax.experimental.pallas import tpu as pltpu

LATENT_DIM = 20
HIDDEN_DIM = 400
DATA_DIM = 784

# Padded (MXU / lane friendly) dims.
LATENT_PAD = 128   # 20  -> one dense MXU pass
HIDDEN_PAD = 512   # 400 -> multiple of 256 (v6e/v7x MXU width) and 128 (v5e)
DATA_PAD = 896     # 784 -> lane-dense output (7 x 128), unmasked vst


def _round_up(x: int, m: int) -> int:
    return ((x + m - 1) // m) * m


def generator_kernel(z_ref, w1_ref, b1_ref, w2_ref, b2_ref, o_ref):
    # Hidden layer: [TB, 128]bf16 @ [128, 512]bf16 -> f32 acc, +bias, ReLU.
    h = jnp.dot(z_ref[...], w1_ref[...], preferred_element_type=jnp.float32)
    h = jnp.maximum(h + b1_ref[...], 0.0)
    # Output layer: [TB, 512]bf16 @ [512, 896]bf16 -> f32 acc, +bias, Sigmoid.
    logits = jnp.dot(h.astype(jnp.bfloat16), w2_ref[...],
                     preferred_element_type=jnp.float32)
    o_ref[...] = jax.nn.sigmoid(logits + b2_ref[...]).astype(o_ref.dtype)


def prepare_params(w1, b1, w2, b2):
    """Pad unpadded f32 params to MXU-friendly shapes; weights stored as bf16."""
    w1p = jnp.zeros((LATENT_PAD, HIDDEN_PAD), jnp.float32).at[:LATENT_DIM, :HIDDEN_DIM].set(w1)
    b1p = jnp.zeros((1, HIDDEN_PAD), jnp.float32).at[:, :HIDDEN_DIM].set(b1)
    w2p = jnp.zeros((HIDDEN_PAD, DATA_PAD), jnp.float32).at[:HIDDEN_DIM, :DATA_DIM].set(w2)
    b2p = jnp.zeros((1, DATA_PAD), jnp.float32).at[:, :DATA_DIM].set(b2)
    return w1p.astype(jnp.bfloat16), b1p, w2p.astype(jnp.bfloat16), b2p


@functools.partial(jax.jit, static_argnames=("tile_b",))
def _generator_forward_padded(z_pad, w1p, b1p, w2p, b2p, *, tile_b):
    b_pad = z_pad.shape[0]
    grid = (pl.cdiv(b_pad, tile_b),)
    flops = 2 * b_pad * (LATENT_PAD * HIDDEN_PAD + HIDDEN_PAD * DATA_PAD)
    bytes_accessed = (
        b_pad * LATENT_PAD * 2                     # z (bf16)
        + (LATENT_PAD * HIDDEN_PAD + HIDDEN_PAD * DATA_PAD) * 2   # weights (bf16)
        + (HIDDEN_PAD + DATA_PAD) * 4              # biases (f32)
        + b_pad * DATA_PAD * 4                     # output (f32)
    )
    return pl.pallas_call(
        generator_kernel,
        out_shape=jax.ShapeDtypeStruct((b_pad, DATA_PAD), jnp.float32),
        grid=grid,
        in_specs=[
            pl.BlockSpec((tile_b, LATENT_PAD), lambda i: (i, 0)),   # z tile (pipelined)
            pl.BlockSpec((LATENT_PAD, HIDDEN_PAD), lambda i: (0, 0)),  # w1 resident
            pl.BlockSpec((1, HIDDEN_PAD), lambda i: (0, 0)),           # b1 resident
            pl.BlockSpec((HIDDEN_PAD, DATA_PAD), lambda i: (0, 0)),    # w2 resident
            pl.BlockSpec((1, DATA_PAD), lambda i: (0, 0)),             # b2 resident
        ],
        out_specs=pl.BlockSpec((tile_b, DATA_PAD), lambda i: (i, 0)),
        compiler_params=pltpu.CompilerParams(
            dimension_semantics=("parallel",),      # megacore split on v7x
            vmem_limit_bytes=32 * 1024 * 1024,      # safe on v7x's 64 MiB VMEM
        ),
        cost_estimate=pl.CostEstimate(
            flops=flops,
            transcendentals=b_pad * DATA_PAD,       # sigmoid exp
            bytes_accessed=bytes_accessed,
        ),
    )(z_pad, w1p, b1p, w2p, b2p)


def generator_forward(z, w1p, b1p, w2p, b2p):
    """z: [B, 20] float32 -> [B, 784] float32 (sigmoid outputs)."""
    B = z.shape[0]
    tile_b = min(256, _round_up(B, 8))
    b_pad = _round_up(B, tile_b)
    z_pad = jnp.zeros((b_pad, LATENT_PAD), jnp.float32).at[:B, :LATENT_DIM].set(z)
    z_pad = z_pad.astype(jnp.bfloat16)  # halves z DMA bytes; MXU is bf16-native
    out = _generator_forward_padded(z_pad, w1p, b1p, w2p, b2p, tile_b=tile_b)
    return out[:B, :DATA_DIM]


def init_params(key):
    """Mirror nn.Linear default init: U[-1/sqrt(fan_in), 1/sqrt(fan_in)]."""
    k1, k2, k3, k4 = jax.random.split(key, 4)
    bound1 = 1.0 / jnp.sqrt(LATENT_DIM)
    bound2 = 1.0 / jnp.sqrt(HIDDEN_DIM)
    w1 = jax.random.uniform(k1, (LATENT_DIM, HIDDEN_DIM), jnp.float32, -bound1, bound1)
    b1 = jax.random.uniform(k2, (1, HIDDEN_DIM), jnp.float32, -bound1, bound1)
    w2 = jax.random.uniform(k3, (HIDDEN_DIM, DATA_DIM), jnp.float32, -bound2, bound2)
    b2 = jax.random.uniform(k4, (1, DATA_DIM), jnp.float32, -bound2, bound2)
    return w1, b1, w2, b2


def reference_forward_f32(z, w1, b1, w2, b2):
    h = jnp.maximum(z @ w1 + b1, 0.0)
    return jax.nn.sigmoid(h @ w2 + b2)


def reference_forward_bf16(z, w1, b1, w2, b2):
    """Same bf16-input / f32-accumulate recipe as the kernel."""
    h = jnp.dot(z.astype(jnp.bfloat16), w1.astype(jnp.bfloat16),
                preferred_element_type=jnp.float32) + b1
    h = jnp.maximum(h, 0.0)
    logits = jnp.dot(h.astype(jnp.bfloat16), w2.astype(jnp.bfloat16),
                     preferred_element_type=jnp.float32) + b2
    return jax.nn.sigmoid(logits)


if __name__ == "__main__":
    key = jax.random.PRNGKey(0)
    kz, kp = jax.random.split(key)

    B = 8  # small batch for the demo (kernel tiles/scales to any B)
    z = jax.random.normal(kz, (B, LATENT_DIM), dtype=jnp.float32)
    w1, b1, w2, b2 = init_params(kp)
    w1p, b1p, w2p, b2p = prepare_params(w1, b1, w2, b2)

    x_hat = generator_forward(z, w1p, b1p, w2p, b2p)
    x_hat = jax.block_until_ready(x_hat)
    assert x_hat.shape == (B, DATA_DIM)

    # Tight check against a reference using the same bf16-matmul recipe.
    ref_bf16 = reference_forward_bf16(z, w1, b1, w2, b2)
    assert jnp.allclose(x_hat, ref_bf16, atol=1e-3, rtol=1e-3), "mismatch vs bf16 reference"

    # Loose check against the pure-f32 PyTorch-equivalent forward.
    ref_f32 = reference_forward_f32(z, w1, b1, w2, b2)
    assert jnp.allclose(x_hat, ref_f32, atol=2e-2, rtol=2e-2), "mismatch vs f32 reference"

    print("KERNEL_OK")
</pallas_src>

<mosaic_0001>
module attributes {stable_mosaic.version = 11 : i64} {
  func.func @generator_kernel(%arg0: i32, %arg1: memref<8x128xbf16, #tpu.memory_space<vmem>>, %arg2: memref<128x512xbf16, #tpu.memory_space<vmem>>, %arg3: memref<1x512xf32, #tpu.memory_space<vmem>>, %arg4: memref<512x896xbf16, #tpu.memory_space<vmem>>, %arg5: memref<1x896xf32, #tpu.memory_space<vmem>>, %arg6: memref<8x896xf32, #tpu.memory_space<vmem>>) attributes {dimension_semantics = [#tpu.dimension_semantics<parallel>], iteration_bounds = array<i64: 1>, scalar_prefetch = 0 : i64, scratch_operands = 0 : i64, tpu.core_type = #tpu.core_type<tc>, window_params = [{transform_indices = @transform_0, window_bounds = array<i64: 8, 128>}, {pipeline_mode = #tpu.pipeline_mode<synchronous>, transform_indices = @transform_1, window_bounds = array<i64: 128, 512>}, {pipeline_mode = #tpu.pipeline_mode<synchronous>, transform_indices = @transform_2, window_bounds = array<i64: 1, 512>}, {pipeline_mode = #tpu.pipeline_mode<synchronous>, transform_indices = @transform_3, window_bounds = array<i64: 512, 896>}, {pipeline_mode = #tpu.pipeline_mode<synchronous>, transform_indices = @transform_4, window_bounds = array<i64: 1, 896>}, {transform_indices = @transform_5, window_bounds = array<i64: 8, 896>}]} {
    %c0 = arith.constant 0 : index
    %c0_0 = arith.constant 0 : index
    %0 = vector.load %arg1[%c0, %c0_0] : memref<8x128xbf16, #tpu.memory_space<vmem>>, vector<8x128xbf16>
    %c0_1 = arith.constant 0 : index
    %c0_2 = arith.constant 0 : index
    %1 = vector.load %arg2[%c0_1, %c0_2] : memref<128x512xbf16, #tpu.memory_space<vmem>>, vector<128x512xbf16>
    %cst = arith.constant dense<0.000000e+00> : vector<8x512xf32>
    %2 = tpu.matmul %0, %1, %cst {dimension_numbers = #tpu.dot_dimension_numbers<[1], [0], [0], [1], [0, 0, 1, 1], [], []>} : vector<8x128xbf16>, vector<128x512xbf16>, vector<8x512xf32> -> vector<8x512xf32>
    %c0_3 = arith.constant 0 : index
    %c0_4 = arith.constant 0 : index
    %3 = vector.load %arg3[%c0_3, %c0_4] : memref<1x512xf32, #tpu.memory_space<vmem>>, vector<1x512xf32>
    %4 = vector.broadcast %3 : vector<1x512xf32> to vector<8x512xf32>
    %5 = arith.addf %2, %4 : vector<8x512xf32>
    %cst_5 = arith.constant 0.000000e+00 : f32
    %6 = vector.broadcast %cst_5 : f32 to vector<8x512xf32>
    %7 = arith.maximumf %5, %6 : vector<8x512xf32>
    %8 = arith.truncf %7 : vector<8x512xf32> to vector<8x512xbf16>
    %c0_6 = arith.constant 0 : index
    %c0_7 = arith.constant 0 : index
    %9 = vector.load %arg4[%c0_6, %c0_7] : memref<512x896xbf16, #tpu.memory_space<vmem>>, vector<512x896xbf16>
    %cst_8 = arith.constant dense<0.000000e+00> : vector<8x896xf32>
    %10 = tpu.matmul %8, %9, %cst_8 {dimension_numbers = #tpu.dot_dimension_numbers<[1], [0], [0], [1], [0, 0, 1, 1], [], []>} : vector<8x512xbf16>, vector<512x896xbf16>, vector<8x896xf32> -> vector<8x896xf32>
    %c0_9 = arith.constant 0 : index
    %c0_10 = arith.constant 0 : index
    %11 = vector.load %arg5[%c0_9, %c0_10] : memref<1x896xf32, #tpu.memory_space<vmem>>, vector<1x896xf32>
    %12 = vector.broadcast %11 : vector<1x896xf32> to vector<8x896xf32>
    %13 = arith.addf %10, %12 : vector<8x896xf32>
    %14 = arith.negf %13 : vector<8x896xf32>
    %15 = math.exp %14 : vector<8x896xf32>
    %cst_11 = arith.constant 1.000000e+00 : f32
    %16 = vector.broadcast %cst_11 : f32 to vector<8x896xf32>
    %17 = arith.addf %16, %15 : vector<8x896xf32>
    %18 = arith.divf %16, %17 : vector<8x896xf32>
    %c0_12 = arith.constant 0 : index
    %c0_13 = arith.constant 0 : index
    %19 = vector.load %arg6[%c0_12, %c0_13] : memref<8x896xf32, #tpu.memory_space<vmem>>, vector<8x896xf32>
    tpu.vector_store %arg6[%c0_12, %c0_13], %18 {strides = array<i32>} : memref<8x896xf32, #tpu.memory_space<vmem>>, vector<8x896xf32>,
    return
  }
  func.func @transform_0(%arg0: i32) -> (i32, i32) {
    %c0_i32 = arith.constant 0 : i32
    %c0_i32_0 = arith.constant 0 : i32
    return %arg0, %c0_i32 : i32, i32
  }
  func.func @transform_1(%arg0: i32) -> (i32, i32) {
    %c0_i32 = arith.constant 0 : i32
    %c0_i32_0 = arith.constant 0 : i32
    %c0_i32_1 = arith.constant 0 : i32
    return %c0_i32, %c0_i32_0 : i32, i32
  }
  func.func @transform_2(%arg0: i32) -> (i32, i32) {
    %c0_i32 = arith.constant 0 : i32
    %c0_i32_0 = arith.constant 0 : i32
    %c0_i32_1 = arith.constant 0 : i32
    return %c0_i32, %c0_i32_0 : i32, i32
  }
  func.func @transform_3(%arg0: i32) -> (i32, i32) {
    %c0_i32 = arith.constant 0 : i32
    %c0_i32_0 = arith.constant 0 : i32
    %c0_i32_1 = arith.constant 0 : i32
    return %c0_i32, %c0_i32_0 : i32, i32
  }
  func.func @transform_4(%arg0: i32) -> (i32, i32) {
    %c0_i32 = arith.constant 0 : i32
    %c0_i32_0 = arith.constant 0 : i32
    %c0_i32_1 = arith.constant 0 : i32
    return %c0_i32, %c0_i32_0 : i32, i32
  }
  func.func @transform_5(%arg0: i32) -> (i32, i32) {
    %c0_i32 = arith.constant 0 : i32
    %c0_i32_0 = arith.constant 0 : i32
    return %arg0, %c0_i32 : i32, i32
  }
}

</mosaic_0001>

<llo_original>
// kernel: _generator_forward_padded.1
$region0: #{_generator_forward_padded.1}
  #allocation0 [shape = 'u32[]', space=smem, size = 0x4, offset = 0x4, fixed_abs, tag = 'smem constant byte address 0x4 - core index']
  #allocation1 [shape = 'u32[144,128]{1,0:T(1,128)}', space=vmem, size = 0x12000, scoped, tag = 'internal scratch']
  %s0 = inlined_call_operand.hbm [shape: bf16[8,128], index: 0, kind: input, shape index: {}]
  %s1 = inlined_call_operand.hbm [shape: bf16[128,512], index: 1, kind: input, shape index: {}]
  %s2 = inlined_call_operand.hbm [shape: f32[1,512], index: 2, kind: input, shape index: {}]
  %s3 = inlined_call_operand.hbm [shape: bf16[512,896], index: 3, kind: input, shape index: {}]
  %s4 = inlined_call_operand.vmem [shape: f32[1,896], index: 4, kind: input, shape index: {}]
  %s5 = inlined_call_operand.hbm [shape: f32[8,896], index: 5, kind: output, shape index: {}]
  %s6 = sld [smem:[#allocation0]]
  $region46: #{_generator_forward_padded.1} parent=0
    _
  %s8 = ssub.s32 1, %s6
  %s9 = scalar_select 0, %s8, %s6
  $region1: #{_generator_forward_padded.1} parent=0
    #allocation2 [shape = 'u8[2048]{0}', space=vmem, size = 0x800, scoped, tag = 'input window, operand 0, single buffered']
    #allocation3 [shape = 's32[1]{0}', space=sflag, size = 0x4, scoped, tag = 'scoped memory for _generator_forward_padded.1']
    #allocation4 [shape = 's32[1]{0}', space=sflag, size = 0x4, scoped, tag = 'scoped memory for _generator_forward_padded.1']
    #allocation5 [shape = 'u8[131072]{0}', space=vmem, size = 0x20000, scoped, tag = 'input window, operand 1, single buffered']
    #allocation6 [shape = 's32[1]{0}', space=sflag, size = 0x4, scoped, tag = 'scoped memory for _generator_forward_padded.1']
    #allocation7 [shape = 'u8[2048]{0}', space=vmem, size = 0x800, scoped, tag = 'input window, operand 2, single buffered']
    #allocation8 [shape = 'u8[917504]{0}', space=vmem, size = 0xe0000, scoped, tag = 'input window, operand 3, single buffered']
    #allocation9 [shape = 's32[1]{0}', space=sflag, size = 0x4, scoped, tag = 'scoped memory for _generator_forward_padded.1']
    #allocation10 [shape = 'u8[28672]{0}', space=vmem, size = 0x7000, scoped, tag = 'output window, operand 0, single buffered']
    %10 = vsyncpa [#allocation3], 0
    %11 = vsyncpa [#allocation6], 0
    %12 = vsyncpa [#allocation9], 0
    %13 = vsyncpa [#allocation4], 0
    // Predicated region
    $region2: #{_generator_forward_padded.1} parent=1 // pred_check
      _
    $region3: #{_generator_forward_padded.1} parent=1 // pred_check_branch
      %15 = sbr.rel (0) target = $region5
    $region4: #{_generator_forward_padded.1} parent=1 // pred_region
      %s17 = ssub.s32 64, 64
      %18 = vsyncadd [#allocation3], %s17
      %s20 = sshll.u32 [#allocation2], 4
      %s21 = int_to_ptr.vmem [resolvable:$true] %s20
      %23 = dma.hbm_to_vmem [thread:$0]  %s0, 64, %s21, [#allocation3]
    $region5: #{_generator_forward_padded.1} parent=1 // pred_fallthru
      _
    // Predicated region
    $region6: #{_generator_forward_padded.1} parent=1 // pred_check
      _
    $region7: #{_generator_forward_padded.1} parent=1 // pred_check_branch
      %25 = sbr.rel (0) target = $region9
    $region8: #{_generator_forward_padded.1} parent=1 // pred_region
      %s27 = ssub.s32 4096, 4096
      %28 = vsyncadd [#allocation6], %s27
      %s29 = sshll.u32 [#allocation5], 4
      %s30 = int_to_ptr.vmem [resolvable:$true] %s29
      %35 = dma.hbm_to_vmem [thread:$0]  %s1, 4096, %s30, [#allocation6], 256, 256, 16
    $region9: #{_generator_forward_padded.1} parent=1 // pred_fallthru
      _
    // Predicated region
    $region10: #{_generator_forward_padded.1} parent=1 // pred_check
      _
    $region11: #{_generator_forward_padded.1} parent=1 // pred_check_branch
      %37 = sbr.rel (0) target = $region13
    $region12: #{_generator_forward_padded.1} parent=1 // pred_region
      %s39 = ssub.s32 64, 64
      %40 = vsyncadd [#allocation6], %s39
      %s42 = sshll.u32 [#allocation7], 4
      %s43 = int_to_ptr.vmem [resolvable:$true] %s42
      %45 = dma.hbm_to_vmem [thread:$0]  %s2, 64, %s43, [#allocation6]
    $region13: #{_generator_forward_padded.1} parent=1 // pred_fallthru
      _
    // Predicated region
    $region14: #{_generator_forward_padded.1} parent=1 // pred_check
      _
    $region15: #{_generator_forward_padded.1} parent=1 // pred_check_branch
      %47 = sbr.rel (0) target = $region17
    $region16: #{_generator_forward_padded.1} parent=1 // pred_region
      %s49 = ssub.s32 28672, 28672
      %50 = vsyncadd [#allocation9], %s49
      %s51 = sshll.u32 [#allocation8], 4
      %s52 = int_to_ptr.vmem [resolvable:$true] %s51
      %57 = dma.hbm_to_vmem [thread:$0]  %s3, 28672, %s52, [#allocation9], 448, 448, 28
    $region17: #{_generator_forward_padded.1} parent=1 // pred_fallthru
      _
    // Predicated region
    $region18: #{_generator_forward_padded.1} parent=1 // pred_check
      _
    $region19: #{_generator_forward_padded.1} parent=1 // pred_check_branch
      %59 = sbr.rel (0) target = $region21
    $region20: #{_generator_forward_padded.1} parent=1 // pred_region
      _
    $region21: #{_generator_forward_padded.1} parent=1 // pred_fallthru
      _
    // Predicated region
    $region22: #{_generator_forward_padded.1} parent=1 // pred_check
      _
    $region23: #{_generator_forward_padded.1} parent=1 // pred_check_branch
      %61 = sbr.rel (0) target = $region25
    $region24: #{_generator_forward_padded.1} parent=1 // pred_region
      %62 = dma.done [#allocation3], 64
    $region25: #{_generator_forward_padded.1} parent=1 // pred_fallthru
      _
    // Predicated region
    $region26: #{_generator_forward_padded.1} parent=1 // pred_check
      _
    $region27: #{_generator_forward_padded.1} parent=1 // pred_check_branch
      %64 = sbr.rel (0) target = $region29
    $region28: #{_generator_forward_padded.1} parent=1 // pred_region
      %65 = dma.done [#allocation6], 4096
    $region29: #{_generator_forward_padded.1} parent=1 // pred_fallthru
      _
    // Predicated region
    $region30: #{_generator_forward_padded.1} parent=1 // pred_check
      _
    $region31: #{_generator_forward_padded.1} parent=1 // pred_check_branch
      %67 = sbr.rel (0) target = $region33
    $region32: #{_generator_forward_padded.1} parent=1 // pred_region
      %68 = dma.done [#allocation6], 64
    $region33: #{_generator_forward_padded.1} parent=1 // pred_fallthru
      _
    // Predicated region
    $region34: #{_generator_forward_padded.1} parent=1 // pred_check
      _
    $region35: #{_generator_forward_padded.1} parent=1 // pred_check_branch
      %70 = sbr.rel (0) target = $region37
    $region36: #{_generator_forward_padded.1} parent=1 // pred_region
      %71 = dma.done [#allocation9], 28672
    $region37: #{_generator_forward_padded.1} parent=1 // pred_fallthru
      _
    %v73 = vld [vmem:[#allocation2] sm:$0xf]
    %v74 = vld [vmem:[#allocation5] sm:$0xff]
    %v75 = vld [vmem:[#allocation5 + $0x8] sm:$0xff]
    %v76 = vld [vmem:[#allocation5 + $0x10] sm:$0xff]
    %v77 = vld [vmem:[#allocation5 + $0x18] sm:$0xff]
    %v78 = vld [vmem:[#allocation5 + $0x20] sm:$0xff]
    %v79 = vld [vmem:[#allocation5 + $0x28] sm:$0xff]
    %v80 = vld [vmem:[#allocation5 + $0x30] sm:$0xff]
    %v81 = vld [vmem:[#allocation5 + $0x38] sm:$0xff]
    %v82 = vld [vmem:[#allocation5 + $0x40] sm:$0xff]
    %v83 = vld [vmem:[#allocation5 + $0x48] sm:$0xff]
    %v84 = vld [vmem:[#allocation5 + $0x50] sm:$0xff]
    %v85 = vld [vmem:[#allocation5 + $0x58] sm:$0xff]
    %v86 = vld [vmem:[#allocation5 + $0x60] sm:$0xff]
    %v87 = vld [vmem:[#allocation5 + $0x68] sm:$0xff]
    %v88 = vld [vmem:[#allocation5 + $0x70] sm:$0xff]
    %v89 = vld [vmem:[#allocation5 + $0x78] sm:$0xff]
    %v90 = vld [vmem:[#allocation5 + $0x80] sm:$0xff]
    %v91 = vld [vmem:[#allocation5 + $0x88] sm:$0xff]
    %v92 = vld [vmem:[#allocation5 + $0x90] sm:$0xff]
    %v93 = vld [vmem:[#allocation5 + $0x98] sm:$0xff]
    %v94 = vld [vmem:[#allocation5 + $0xa0] sm:$0xff]
    %v95 = vld [vmem:[#allocation5 + $0xa8] sm:$0xff]
    %v96 = vld [vmem:[#allocation5 + $0xb0] sm:$0xff]
    %v97 = vld [vmem:[#allocation5 + $0xb8] sm:$0xff]
    %v98 = vld [vmem:[#allocation5 + $0xc0] sm:$0xff]
    %v99 = vld [vmem:[#allocation5 + $0xc8] sm:$0xff]
    %v100 = vld [vmem:[#allocation5 + $0xd0] sm:$0xff]
    %v101 = vld [vmem:[#allocation5 + $0xd8] sm:$0xff]
    %v102 = vld [vmem:[#allocation5 + $0xe0] sm:$0xff]
    %v103 = vld [vmem:[#allocation5 + $0xe8] sm:$0xff]
    %v104 = vld [vmem:[#allocation5 + $0xf0] sm:$0xff]
    %v105 = vld [vmem:[#allocation5 + $0xf8] sm:$0xff]
    %v106 = vld [vmem:[#allocation7] sm:$0xf]
    %v108 = vlaneseq
    %v109 = vshrl.u32 %v108, 7
    %v110 = vsub.s32 0, %v109
    %v111 = vrot.slane %v106, %v110
    %v112 = vlaneseq
    %v113 = vshrl.u32 %v112, 7
    %v114 = vsub.s32 1, %v113
    %v115 = vrot.slane %v106, %v114
    %v116 = vlaneseq
    %v117 = vshrl.u32 %v116, 7
    %v118 = vsub.s32 2, %v117
    %v119 = vrot.slane %v106, %v118
    %v120 = vlaneseq
    %v121 = vshrl.u32 %v120, 7
    %v122 = vsub.s32 3, %v121
    %v123 = vrot.slane %v106, %v122
    %v160 = vunpack.c.l.b16 %v74
    %v161 = vunpack.c.h.b16 %v74
    %v162 = vunpack.c.l.b16 %v75
    %v163 = vunpack.c.h.b16 %v75
    %v164 = vunpack.c.l.b16 %v76
    %v165 = vunpack.c.h.b16 %v76
    %v166 = vunpack.c.l.b16 %v77
    %v167 = vunpack.c.h.b16 %v77
    %v168 = vunpack.c.l.b16 %v78
    %v169 = vunpack.c.h.b16 %v78
    %v170 = vunpack.c.l.b16 %v79
    %v171 = vunpack.c.h.b16 %v79
    %v172 = vunpack.c.l.b16 %v80
    %v173 = vunpack.c.h.b16 %v80
    %v174 = vunpack.c.l.b16 %v81
    %v175 = vunpack.c.h.b16 %v81
    %v176 = vunpack.c.l.b16 %v82
    %v177 = vunpack.c.h.b16 %v82
    %v178 = vunpack.c.l.b16 %v83
    %v179 = vunpack.c.h.b16 %v83
    %v180 = vunpack.c.l.b16 %v84
    %v181 = vunpack.c.h.b16 %v84
    %v182 = vunpack.c.l.b16 %v85
    %v183 = vunpack.c.h.b16 %v85
    %v184 = vunpack.c.l.b16 %v86
    %v185 = vunpack.c.h.b16 %v86
    %v186 = vunpack.c.l.b16 %v87
    %v187 = vunpack.c.h.b16 %v87
    %v188 = vunpack.c.l.b16 %v88
    %v189 = vunpack.c.h.b16 %v88
    %v190 = vunpack.c.l.b16 %v89
    %v191 = vunpack.c.h.b16 %v89
    %v192 = vunpack.c.l.b16 %v90
    %v193 = vunpack.c.h.b16 %v90
    %v194 = vunpack.c.l.b16 %v91
    %v195 = vunpack.c.h.b16 %v91
    %v196 = vunpack.c.l.b16 %v92
    %v197 = vunpack.c.h.b16 %v92
    %v198 = vunpack.c.l.b16 %v93
    %v199 = vunpack.c.h.b16 %v93
    %v200 = vunpack.c.l.b16 %v94
    %v201 = vunpack.c.h.b16 %v94
    %v202 = vunpack.c.l.b16 %v95
    %v203 = vunpack.c.h.b16 %v95
    %v204 = vunpack.c.l.b16 %v96
    %v205 = vunpack.c.h.b16 %v96
    %v206 = vunpack.c.l.b16 %v97
    %v207 = vunpack.c.h.b16 %v97
    %v208 = vunpack.c.l.b16 %v98
    %v209 = vunpack.c.h.b16 %v98
    %v210 = vunpack.c.l.b16 %v99
    %v211 = vunpack.c.h.b16 %v99
    %v212 = vunpack.c.l.b16 %v100
    %v213 = vunpack.c.h.b16 %v100
    %v214 = vunpack.c.l.b16 %v101
    %v215 = vunpack.c.h.b16 %v101
    %v216 = vunpack.c.l.b16 %v102
    %v217 = vunpack.c.h.b16 %v102
    %v218 = vunpack.c.l.b16 %v103
    %v219 = vunpack.c.h.b16 %v103
    %v220 = vunpack.c.l.b16 %v104
    %v221 = vunpack.c.h.b16 %v104
    %v222 = vunpack.c.l.b16 %v105
    %v223 = vunpack.c.h.b16 %v105
    %v224 = vpack.c.b16 %v164, %v160
    %v225 = vpack.c.b16 %v165, %v161
    %v226 = vpack.c.b16 %v166, %v162
    %v227 = vpack.c.b16 %v167, %v163
    %v228 = vpack.c.b16 %v172, %v168
    %v229 = vpack.c.b16 %v173, %v169
    %v230 = vpack.c.b16 %v174, %v170
    %v231 = vpack.c.b16 %v175, %v171
    %v232 = vpack.c.b16 %v180, %v176
    %v233 = vpack.c.b16 %v181, %v177
    %v234 = vpack.c.b16 %v182, %v178
    %v235 = vpack.c.b16 %v183, %v179
    %v236 = vpack.c.b16 %v188, %v184
    %v237 = vpack.c.b16 %v189, %v185
    %v238 = vpack.c.b16 %v190, %v186
    %v239 = vpack.c.b16 %v191, %v187
    %v240 = vpack.c.b16 %v196, %v192
    %v241 = vpack.c.b16 %v197, %v193
    %v242 = vpack.c.b16 %v198, %v194
    %v243 = vpack.c.b16 %v199, %v195
    %v244 = vpack.c.b16 %v204, %v200
    %v245 = vpack.c.b16 %v205, %v201
    %v246 = vpack.c.b16 %v206, %v202
    %v247 = vpack.c.b16 %v207, %v203
    %v248 = vpack.c.b16 %v212, %v208
    %v249 = vpack.c.b16 %v213, %v209
    %v250 = vpack.c.b16 %v214, %v210
    %v251 = vpack.c.b16 %v215, %v211
    %v252 = vpack.c.b16 %v220, %v216
    %v253 = vpack.c.b16 %v221, %v217
    %v254 = vpack.c.b16 %v222, %v218
    %v255 = vpack.c.b16 %v223, %v219
    %288 = vmatprep.subr.bf16.mxu0 %v253
    %289 = vmatpush1.bf16.msra.mxu0 %v252
    %290 = vmatprep.subr.bf16.mxu0 %v249
    %291 = vmatpush1.bf16.msra.mxu0 %v248
    %292 = vmatprep.subr.bf16.mxu0 %v245
    %293 = vmatpush1.bf16.msra.mxu0 %v244
    %294 = vmatprep.subr.bf16.mxu0 %v241
    %295 = vmatpush1.bf16.msra.mxu0 %v240
    %296 = vmatprep.subr.bf16.mxu0 %v237
    %297 = vmatpush1.bf16.msra.mxu0 %v236
    %298 = vmatprep.subr.bf16.mxu0 %v233
    %299 = vmatpush1.bf16.msra.mxu0 %v232
    %300 = vmatprep.subr.bf16.mxu0 %v229
    %301 = vmatpush1.bf16.msra.mxu0 %v228
    %302 = vmatprep.subr.bf16.mxu0 %v225
    %303 = vmatpush1.bf16.msra.mxu0 %v224
    %304 = vmatprep.subr.bf16.mxu0 0
    %305 = vmatpush2.bf16.msra.mxu0 0
    %306 = vmatprep.subr.bf16.mxu0 0
    %307 = vmatpush2.bf16.msra.mxu0 0
    %308 = vmatprep.subr.bf16.mxu0 0
    %309 = vmatpush2.bf16.msra.mxu0 0
    %310 = vmatprep.subr.bf16.mxu0 0
    %311 = vmatpush2.bf16.msra.mxu0 0
    %312 = vmatprep.subr.bf16.mxu0 0
    %313 = vmatpush2.bf16.msra.mxu0 0
    %314 = vmatprep.subr.bf16.mxu0 0
    %315 = vmatpush2.bf16.msra.mxu0 0
    %316 = vmatprep.subr.bf16.mxu0 0
    %317 = vmatpush2.bf16.msra.mxu0 0
    %318 = vmatprep.subr.bf16.mxu0 0
    %319 = vmatpush2.bf16.msra.mxu0 0
    %320 = vmatprep.mubr.bf16.mxu0 0
    %321 = vmatmul.mubr.bf16.gmra.mxu0 %v73
    %v322 = vpop.f32.mrf.mxu0
    %v323 = vadd.f32 %v111, %v322
    %v324 = vpop.f32.mrf.mxu0
    %v325 = vadd.f32 %v115, %v324
    %v326 = vpop.f32.mrf.mxu0
    %v327 = vpop.f32.mrf.mxu0
    %328 = vdwg.mxu0
    %329 = vmatprep.subr.bf16.mxu0 %v255
    %330 = vmatpush1.bf16.msra.mxu0 %v254
    %331 = vmatprep.subr.bf16.mxu0 %v251
    %332 = vmatpush1.bf16.msra.mxu0 %v250
    %333 = vmatprep.subr.bf16.mxu0 %v247
    %334 = vmatpush1.bf16.msra.mxu0 %v246
    %335 = vmatprep.subr.bf16.mxu0 %v243
    %336 = vmatpush1.bf16.msra.mxu0 %v242
    %337 = vmatprep.subr.bf16.mxu0 %v239
    %338 = vmatpush1.bf16.msra.mxu0 %v238
    %339 = vmatprep.subr.bf16.mxu0 %v235
    %340 = vmatpush1.bf16.msra.mxu0 %v234
    %341 = vmatprep.subr.bf16.mxu0 %v231
    %342 = vmatpush1.bf16.msra.mxu0 %v230
    %343 = vmatprep.subr.bf16.mxu0 %v227
    %344 = vmatpush1.bf16.msra.mxu0 %v226
    %345 = vmatprep.subr.bf16.mxu0 0
    %346 = vmatpush2.bf16.msra.mxu0 0
    %347 = vmatprep.subr.bf16.mxu0 0
    %348 = vmatpush2.bf16.msra.mxu0 0
    %349 = vmatprep.subr.bf16.mxu0 0
    %350 = vmatpush2.bf16.msra.mxu0 0
    %351 = vmatprep.subr.bf16.mxu0 0
    %352 = vmatpush2.bf16.msra.mxu0 0
    %353 = vmatprep.subr.bf16.mxu0 0
    %354 = vmatpush2.bf16.msra.mxu0 0
    %355 = vmatprep.subr.bf16.mxu0 0
    %356 = vmatpush2.bf16.msra.mxu0 0
    %357 = vmatprep.subr.bf16.mxu0 0
    %358 = vmatpush2.bf16.msra.mxu0 0
    %359 = vmatprep.subr.bf16.mxu0 0
    %360 = vmatpush2.bf16.msra.mxu0 0
    %361 = vmatprep.mubr.bf16.mxu0 0
    %362 = vmatmul.mubr.bf16.gmra.mxu0 %v73
    %v363 = vpop.f32.mrf.mxu0
    %v364 = vadd.f32 %v119, %v363
    %v365 = vpop.f32.mrf.mxu0
    %v366 = vadd.f32 %v123, %v365
    %v367 = vpop.f32.mrf.mxu0
    %v368 = vpop.f32.mrf.mxu0
    %369 = vdwg.mxu0
    %v370 = vmax.f32 %v323, 0.0
    %v371 = vmax.f32 %v325, 0.0
    %v372 = vmax.f32 %v364, 0.0
    %v373 = vmax.f32 %v366, 0.0
    %v374 = vpack.c.bf16 %v370, %v370
    %v375 = vpack.c.bf16 %v371, %v371
    %v376 = vpack.c.bf16 %v372, %v372
    %v377 = vpack.c.bf16 %v373, %v373
    %v378 = vld [vmem:[#allocation8] sm:$0xff]
    %v379 = vld [vmem:[#allocation8 + $0x8] sm:$0xff]
    %v380 = vld [vmem:[#allocation8 + $0x10] sm:$0xff]
    %v381 = vld [vmem:[#allocation8 + $0x18] sm:$0xf]
    %v382 = vld [vmem:[#allocation8 + $0x1c] sm:$0xff]
    %v383 = vld [vmem:[#allocation8 + $0x24] sm:$0xff]
    %v384 = vld [vmem:[#allocation8 + $0x2c] sm:$0xff]
    %v385 = vld [vmem:[#allocation8 + $0x34] sm:$0xf]
    %v386 = vld [vmem:[#allocation8 + $0x38] sm:$0xff]
    %v387 = vld [vmem:[#allocation8 + $0x40] sm:$0xff]
    %v388 = vld [vmem:[#allocation8 + $0x48] sm:$0xff]
    %v389 = vld [vmem:[#allocation8 + $0x50] sm:$0xf]
    %v390 = vld [vmem:[#allocation8 + $0x54] sm:$0xff]
    %v391 = vld [vmem:[#allocation8 + $0x5c] sm:$0xff]
    %v392 = vld [vmem:[#allocation8 + $0x64] sm:$0xff]
    %v393 = vld [vmem:[#allocation8 + $0x6c] sm:$0xf]
    %v394 = vld [vmem:[#allocation8 + $0x70] sm:$0xff]
    %v395 = vld [vmem:[#allocation8 + $0x78] sm:$0xff]
    %v396 = vld [vmem:[#allocation8 + $0x80] sm:$0xff]
    %v397 = vld [vmem:[#allocation8 + $0x88] sm:$0xf]
    %v398 = vld [vmem:[#allocation8 + $0x8c] sm:$0xff]
    %v399 = vld [vmem:[#allocation8 + $0x94] sm:$0xff]
    %v400 = vld [vmem:[#allocation8 + $0x9c] sm:$0xff]
    %v401 = vld [vmem:[#allocation8 + $0xa4] sm:$0xf]
    %v402 = vld [vmem:[#allocation8 + $0xa8] sm:$0xff]
    %v403 = vld [vmem:[#allocation8 + $0xb0] sm:$0xff]
    %v404 = vld [vmem:[#allocation8 + $0xb8] sm:$0xff]
    %v405 = vld [vmem:[#allocation8 + $0xc0] sm:$0xf]
    %v406 = vld [vmem:[#allocation8 + $0xc4] sm:$0xff]
    %v407 = vld [vmem:[#allocation8 + $0xcc] sm:$0xff]
    %v408 = vld [vmem:[#allocation8 + $0xd4] sm:$0xff]
    %v409 = vld [vmem:[#allocation8 + $0xdc] sm:$0xf]
    %v410 = vld [vmem:[#allocation8 + $0xe0] sm:$0xff]
    %v411 = vld [vmem:[#allocation8 + $0xe8] sm:$0xff]
    %v412 = vld [vmem:[#allocation8 + $0xf0] sm:$0xff]
    %v413 = vld [vmem:[#allocation8 + $0xf8] sm:$0xf]
    %v414 = vld [vmem:[#allocation8 + $0xfc] sm:$0xff]
    %v415 = vld [vmem:[#allocation8 + $0x104] sm:$0xff]
    %v416 = vld [vmem:[#allocation8 + $0x10c] sm:$0xff]
    %v417 = vld [vmem:[#allocation8 + $0x114] sm:$0xf]
    %v418 = vld [vmem:[#allocation8 + $0x118] sm:$0xff]
    %v419 = vld [vmem:[#allocation8 + $0x120] sm:$0xff]
    %v420 = vld [vmem:[#allocation8 + $0x128] sm:$0xff]
    %v421 = vld [vmem:[#allocation8 + $0x130] sm:$0xf]
    %v422 = vld [vmem:[#allocation8 + $0x134] sm:$0xff]
    %v423 = vld [vmem:[#allocation8 + $0x13c] sm:$0xff]
    %v424 = vld [vmem:[#allocation8 + $0x144] sm:$0xff]
    %v425 = vld [vmem:[#allocation8 + $0x14c] sm:$0xf]
    %v426 = vld [vmem:[#allocation8 + $0x150] sm:$0xff]
    %v427 = vld [vmem:[#allocation8 + $0x158] sm:$0xff]
    %v428 = vld [vmem:[#allocation8 + $0x160] sm:$0xff]
    %v429 = vld [vmem:[#allocation8 + $0x168] sm:$0xf]
    %v430 = vld [vmem:[#allocation8 + $0x16c] sm:$0xff]
    %v431 = vld [vmem:[#allocation8 + $0x174] sm:$0xff]
    %v432 = vld [vmem:[#allocation8 + $0x17c] sm:$0xff]
    %v433 = vld [vmem:[#allocation8 + $0x184] sm:$0xf]
    %v434 = vld [vmem:[#allocation8 + $0x188] sm:$0xff]
    %v435 = vld [vmem:[#allocation8 + $0x190] sm:$0xff]
    %v436 = vld [vmem:[#allocation8 + $0x198] sm:$0xff]
    %v437 = vld [vmem:[#allocation8 + $0x1a0] sm:$0xf]
    %v438 = vld [vmem:[#allocation8 + $0x1a4] sm:$0xff]
    %v439 = vld [vmem:[#allocation8 + $0x1ac] sm:$0xff]
    %v440 = vld [vmem:[#allocation8 + $0x1b4] sm:$0xff]
    %v441 = vld [vmem:[#allocation8 + $0x1bc] sm:$0xf]
    %v442 = vld [vmem:[#allocation8 + $0x1c0] sm:$0xff]
    %v443 = vld [vmem:[#allocation8 + $0x1c8] sm:$0xff]
    %v444 = vld [vmem:[#allocation8 + $0x1d0] sm:$0xff]
    %v445 = vld [vmem:[#allocation8 + $0x1d8] sm:$0xf]
    %v446 = vld [vmem:[#allocation8 + $0x1dc] sm:$0xff]
    %v447 = vld [vmem:[#allocation8 + $0x1e4] sm:$0xff]
    %v448 = vld [vmem:[#allocation8 + $0x1ec] sm:$0xff]
    %v449 = vld [vmem:[#allocation8 + $0x1f4] sm:$0xf]
    %v450 = vld [vmem:[#allocation8 + $0x1f8] sm:$0xff]
    %v451 = vld [vmem:[#allocation8 + $0x200] sm:$0xff]
    %v452 = vld [vmem:[#allocation8 + $0x208] sm:$0xff]
    %v453 = vld [vmem:[#allocation8 + $0x210] sm:$0xf]
    %v454 = vld [vmem:[#allocation8 + $0x214] sm:$0xff]
    %v455 = vld [vmem:[#allocation8 + $0x21c] sm:$0xff]
    %v456 = vld [vmem:[#allocation8 + $0x224] sm:$0xff]
    %v457 = vld [vmem:[#allocation8 + $0x22c] sm:$0xf]
    %v458 = vld [vmem:[#allocation8 + $0x230] sm:$0xff]
    %v459 = vld [vmem:[#allocation8 + $0x238] sm:$0xff]
    %v460 = vld [vmem:[#allocation8 + $0x240] sm:$0xff]
    %v461 = vld [vmem:[#allocation8 + $0x248] sm:$0xf]
    %v462 = vld [vmem:[#allocation8 + $0x24c] sm:$0xff]
    %v463 = vld [vmem:[#allocation8 + $0x254] sm:$0xff]
    %v464 = vld [vmem:[#allocation8 + $0x25c] sm:$0xff]
    %v465 = vld [vmem:[#allocation8 + $0x264] sm:$0xf]
    %v466 = vld [vmem:[#allocation8 + $0x268] sm:$0xff]
    %v467 = vld [vmem:[#allocation8 + $0x270] sm:$0xff]
    %v468 = vld [vmem:[#allocation8 + $0x278] sm:$0xff]
    %v469 = vld [vmem:[#allocation8 + $0x280] sm:$0xf]
    %v470 = vld [vmem:[#allocation8 + $0x284] sm:$0xff]
    %v471 = vld [vmem:[#allocation8 + $0x28c] sm:$0xff]
    %v472 = vld [vmem:[#allocation8 + $0x294] sm:$0xff]
    %v473 = vld [vmem:[#allocation8 + $0x29c] sm:$0xf]
    %v474 = vld [vmem:[#allocation8 + $0x2a0] sm:$0xff]
    %v475 = vld [vmem:[#allocation8 + $0x2a8] sm:$0xff]
    %v476 = vld [vmem:[#allocation8 + $0x2b0] sm:$0xff]
    %v477 = vld [vmem:[#allocation8 + $0x2b8] sm:$0xf]
    %v478 = vld [vmem:[#allocation8 + $0x2bc] sm:$0xff]
    %v479 = vld [vmem:[#allocation8 + $0x2c4] sm:$0xff]
    %v480 = vld [vmem:[#allocation8 + $0x2cc] sm:$0xff]
    %v481 = vld [vmem:[#allocation8 + $0x2d4] sm:$0xf]
    %v482 = vld [vmem:[#allocation8 + $0x2d8] sm:$0xff]
    %v483 = vld [vmem:[#allocation8 + $0x2e0] sm:$0xff]
    %v484 = vld [vmem:[#allocation8 + $0x2e8] sm:$0xff]
    %v485 = vld [vmem:[#allocation8 + $0x2f0] sm:$0xf]
    %v486 = vld [vmem:[#allocation8 + $0x2f4] sm:$0xff]
    %v487 = vld [vmem:[#allocation8 + $0x2fc] sm:$0xff]
    %v488 = vld [vmem:[#allocation8 + $0x304] sm:$0xff]
    %v489 = vld [vmem:[#allocation8 + $0x30c] sm:$0xf]
    %v490 = vld [vmem:[#allocation8 + $0x310] sm:$0xff]
    %v491 = vld [vmem:[#allocation8 + $0x318] sm:$0xff]
    %v492 = vld [vmem:[#allocation8 + $0x320] sm:$0xff]
    %v493 = vld [vmem:[#allocation8 + $0x328] sm:$0xf]
    %v494 = vld [vmem:[#allocation8 + $0x32c] sm:$0xff]
    %v495 = vld [vmem:[#allocation8 + $0x334] sm:$0xff]
    %v496 = vld [vmem:[#allocation8 + $0x33c] sm:$0xff]
    %v497 = vld [vmem:[#allocation8 + $0x344] sm:$0xf]
    %v498 = vld [vmem:[#allocation8 + $0x348] sm:$0xff]
    %v499 = vld [vmem:[#allocation8 + $0x350] sm:$0xff]
    %v500 = vld [vmem:[#allocation8 + $0x358] sm:$0xff]
    %v501 = vld [vmem:[#allocation8 + $0x360] sm:$0xf]
    %v502 = vld [vmem:[#allocation8 + $0x364] sm:$0xff]
    %v503 = vld [vmem:[#allocation8 + $0x36c] sm:$0xff]
    %v504 = vld [vmem:[#allocation8 + $0x374] sm:$0xff]
    %v505 = vld [vmem:[#allocation8 + $0x37c] sm:$0xf]
    %v506 = vld [vmem:[#allocation8 + $0x380] sm:$0xff]
    %v507 = vld [vmem:[#allocation8 + $0x388] sm:$0xff]
    %v508 = vld [vmem:[#allocation8 + $0x390] sm:$0xff]
    %v509 = vld [vmem:[#allocation8 + $0x398] sm:$0xf]
    %v510 = vld [vmem:[#allocation8 + $0x39c] sm:$0xff]
    %v511 = vld [vmem:[#allocation8 + $0x3a4] sm:$0xff]
    %v512 = vld [vmem:[#allocation8 + $0x3ac] sm:$0xff]
    %v513 = vld [vmem:[#allocation8 + $0x3b4] sm:$0xf]
    %v514 = vld [vmem:[#allocation8 + $0x3b8] sm:$0xff]
    %v515 = vld [vmem:[#allocation8 + $0x3c0] sm:$0xff]
    %v516 = vld [vmem:[#allocation8 + $0x3c8] sm:$0xff]
    %v517 = vld [vmem:[#allocation8 + $0x3d0] sm:$0xf]
    %v518 = vld [vmem:[#allocation8 + $0x3d4] sm:$0xff]
    %v519 = vld [vmem:[#allocation8 + $0x3dc] sm:$0xff]
    %v520 = vld [vmem:[#allocation8 + $0x3e4] sm:$0xff]
    %v521 = vld [vmem:[#allocation8 + $0x3ec] sm:$0xf]
    %v522 = vld [vmem:[#allocation8 + $0x3f0] sm:$0xff]
    %v523 = vld [vmem:[#allocation8 + $0x3f8] sm:$0xff]
    %v524 = vld [vmem:[#allocation8 + $0x400] sm:$0xff]
    %v525 = vld [vmem:[#allocation8 + $0x408] sm:$0xf]
    %v526 = vld [vmem:[#allocation8 + $0x40c] sm:$0xff]
    %v527 = vld [vmem:[#allocation8 + $0x414] sm:$0xff]
    %v528 = vld [vmem:[#allocation8 + $0x41c] sm:$0xff]
    %v529 = vld [vmem:[#allocation8 + $0x424] sm:$0xf]
    %v530 = vld [vmem:[#allocation8 + $0x428] sm:$0xff]
    %v531 = vld [vmem:[#allocation8 + $0x430] sm:$0xff]
    %v532 = vld [vmem:[#allocation8 + $0x438] sm:$0xff]
    %v533 = vld [vmem:[#allocation8 + $0x440] sm:$0xf]
    %v534 = vld [vmem:[#allocation8 + $0x444] sm:$0xff]
    %v535 = vld [vmem:[#allocation8 + $0x44c] sm:$0xff]
    %v536 = vld [vmem:[#allocation8 + $0x454] sm:$0xff]
    %v537 = vld [vmem:[#allocation8 + $0x45c] sm:$0xf]
    %v538 = vld [vmem:[#allocation8 + $0x460] sm:$0xff]
    %v539 = vld [vmem:[#allocation8 + $0x468] sm:$0xff]
    %v540 = vld [vmem:[#allocation8 + $0x470] sm:$0xff]
    %v541 = vld [vmem:[#allocation8 + $0x478] sm:$0xf]
    %v542 = vld [vmem:[#allocation8 + $0x47c] sm:$0xff]
    %v543 = vld [vmem:[#allocation8 + $0x484] sm:$0xff]
    %v544 = vld [vmem:[#allocation8 + $0x48c] sm:$0xff]
    %v545 = vld [vmem:[#allocation8 + $0x494] sm:$0xf]
    %v546 = vld [vmem:[#allocation8 + $0x498] sm:$0xff]
    %v547 = vld [vmem:[#allocation8 + $0x4a0] sm:$0xff]
    %v548 = vld [vmem:[#allocation8 + $0x4a8] sm:$0xff]
    %v549 = vld [vmem:[#allocation8 + $0x4b0] sm:$0xf]
    %v550 = vld [vmem:[#allocation8 + $0x4b4] sm:$0xff]
    %v551 = vld [vmem:[#allocation8 + $0x4bc] sm:$0xff]
    %v552 = vld [vmem:[#allocation8 + $0x4c4] sm:$0xff]
    %v553 = vld [vmem:[#allocation8 + $0x4cc] sm:$0xf]
    %v554 = vld [vmem:[#allocation8 + $0x4d0] sm:$0xff]
    %v555 = vld [vmem:[#allocation8 + $0x4d8] sm:$0xff]
    %v556 = vld [vmem:[#allocation8 + $0x4e0] sm:$0xff]
    %v557 = vld [vmem:[#allocation8 + $0x4e8] sm:$0xf]
    %v558 = vld [vmem:[#allocation8 + $0x4ec] sm:$0xff]
    %v559 = vld [vmem:[#allocation8 + $0x4f4] sm:$0xff]
    %v560 = vld [vmem:[#allocation8 + $0x4fc] sm:$0xff]
    %v561 = vld [vmem:[#allocation8 + $0x504] sm:$0xf]
    %v562 = vld [vmem:[#allocation8 + $0x508] sm:$0xff]
    %v563 = vld [vmem:[#allocation8 + $0x510] sm:$0xff]
    %v564 = vld [vmem:[#allocation8 + $0x518] sm:$0xff]
    %v565 = vld [vmem:[#allocation8 + $0x520] sm:$0xf]
    %v566 = vld [vmem:[#allocation8 + $0x524] sm:$0xff]
    %v567 = vld [vmem:[#allocation8 + $0x52c] sm:$0xff]
    %v568 = vld [vmem:[#allocation8 + $0x534] sm:$0xff]
    %v569 = vld [vmem:[#allocation8 + $0x53c] sm:$0xf]
    %v570 = vld [vmem:[#allocation8 + $0x540] sm:$0xff]
    %v571 = vld [vmem:[#allocation8 + $0x548] sm:$0xff]
    %v572 = vld [vmem:[#allocation8 + $0x550] sm:$0xff]
    %v573 = vld [vmem:[#allocation8 + $0x558] sm:$0xf]
    %v574 = vld [vmem:[#allocation8 + $0x55c] sm:$0xff]
    %v575 = vld [vmem:[#allocation8 + $0x564] sm:$0xff]
    %v576 = vld [vmem:[#allocation8 + $0x56c] sm:$0xff]
    %v577 = vld [vmem:[#allocation8 + $0x574] sm:$0xf]
    %v578 = vld [vmem:[#allocation8 + $0x578] sm:$0xff]
    %v579 = vld [vmem:[#allocation8 + $0x580] sm:$0xff]
    %v580 = vld [vmem:[#allocation8 + $0x588] sm:$0xff]
    %v581 = vld [vmem:[#allocation8 + $0x590] sm:$0xf]
    %v582 = vld [vmem:[#allocation8 + $0x594] sm:$0xff]
    %v583 = vld [vmem:[#allocation8 + $0x59c] sm:$0xff]
    %v584 = vld [vmem:[#allocation8 + $0x5a4] sm:$0xff]
    %v585 = vld [vmem:[#allocation8 + $0x5ac] sm:$0xf]
    %v586 = vld [vmem:[#allocation8 + $0x5b0] sm:$0xff]
    %v587 = vld [vmem:[#allocation8 + $0x5b8] sm:$0xff]
    %v588 = vld [vmem:[#allocation8 + $0x5c0] sm:$0xff]
    %v589 = vld [vmem:[#allocation8 + $0x5c8] sm:$0xf]
    %v590 = vld [vmem:[#allocation8 + $0x5cc] sm:$0xff]
    %v591 = vld [vmem:[#allocation8 + $0x5d4] sm:$0xff]
    %v592 = vld [vmem:[#allocation8 + $0x5dc] sm:$0xff]
    %v593 = vld [vmem:[#allocation8 + $0x5e4] sm:$0xf]
    %v594 = vld [vmem:[#allocation8 + $0x5e8] sm:$0xff]
    %v595 = vld [vmem:[#allocation8 + $0x5f0] sm:$0xff]
    %v596 = vld [vmem:[#allocation8 + $0x5f8] sm:$0xff]
    %v597 = vld [vmem:[#allocation8 + $0x600] sm:$0xf]
    %v598 = vld [vmem:[#allocation8 + $0x604] sm:$0xff]
    %v599 = vld [vmem:[#allocation8 + $0x60c] sm:$0xff]
    %v600 = vld [vmem:[#allocation8 + $0x614] sm:$0xff]
    %v601 = vld [vmem:[#allocation8 + $0x61c] sm:$0xf]
    %v602 = vld [vmem:[#allocation8 + $0x620] sm:$0xff]
    %v603 = vld [vmem:[#allocation8 + $0x628] sm:$0xff]
    %v604 = vld [vmem:[#allocation8 + $0x630] sm:$0xff]
    %v605 = vld [vmem:[#allocation8 + $0x638] sm:$0xf]
    %v606 = vld [vmem:[#allocation8 + $0x63c] sm:$0xff]
    %v607 = vld [vmem:[#allocation8 + $0x644] sm:$0xff]
    %v608 = vld [vmem:[#allocation8 + $0x64c] sm:$0xff]
    %v609 = vld [vmem:[#allocation8 + $0x654] sm:$0xf]
    %v610 = vld [vmem:[#allocation8 + $0x658] sm:$0xff]
    %v611 = vld [vmem:[#allocation8 + $0x660] sm:$0xff]
    %v612 = vld [vmem:[#allocation8 + $0x668] sm:$0xff]
    %v613 = vld [vmem:[#allocation8 + $0x670] sm:$0xf]
    %v614 = vld [vmem:[#allocation8 + $0x674] sm:$0xff]
    %v615 = vld [vmem:[#allocation8 + $0x67c] sm:$0xff]
    %v616 = vld [vmem:[#allocation8 + $0x684] sm:$0xff]
    %v617 = vld [vmem:[#allocation8 + $0x68c] sm:$0xf]
    %v618 = vld [vmem:[#allocation8 + $0x690] sm:$0xff]
    %v619 = vld [vmem:[#allocation8 + $0x698] sm:$0xff]
    %v620 = vld [vmem:[#allocation8 + $0x6a0] sm:$0xff]
    %v621 = vld [vmem:[#allocation8 + $0x6a8] sm:$0xf]
    %v622 = vld [vmem:[#allocation8 + $0x6ac] sm:$0xff]
    %v623 = vld [vmem:[#allocation8 + $0x6b4] sm:$0xff]
    %v624 = vld [vmem:[#allocation8 + $0x6bc] sm:$0xff]
    %v625 = vld [vmem:[#allocation8 + $0x6c4] sm:$0xf]
    %v626 = vld [vmem:[#allocation8 + $0x6c8] sm:$0xff]
    %v627 = vld [vmem:[#allocation8 + $0x6d0] sm:$0xff]
    %v628 = vld [vmem:[#allocation8 + $0x6d8] sm:$0xff]
    %v629 = vld [vmem:[#allocation8 + $0x6e0] sm:$0xf]
    %v630 = vld [vmem:[#allocation8 + $0x6e4] sm:$0xff]
    %v631 = vld [vmem:[#allocation8 + $0x6ec] sm:$0xff]
    %v632 = vld [vmem:[#allocation8 + $0x6f4] sm:$0xff]
    %v633 = vld [vmem:[#allocation8 + $0x6fc] sm:$0xf]
    %v634 = vld [vmem:[%s4] sm:$0xff]
    %v636 = vlaneseq
    %v637 = vshrl.u32 %v636, 7
    %v638 = vsub.s32 0, %v637
    %v639 = vrot.slane %v634, %v638
    %v640 = vlaneseq
    %v641 = vshrl.u32 %v640, 7
    %v642 = vsub.s32 1, %v641
    %v643 = vrot.slane %v634, %v642
    %v644 = vlaneseq
    %v645 = vshrl.u32 %v644, 7
    %v646 = vsub.s32 2, %v645
    %v647 = vrot.slane %v634, %v646
    %v648 = vlaneseq
    %v649 = vshrl.u32 %v648, 7
    %v650 = vsub.s32 3, %v649
    %v651 = vrot.slane %v634, %v650
    %v652 = vlaneseq
    %v653 = vshrl.u32 %v652, 7
    %v654 = vsub.s32 4, %v653
    %v655 = vrot.slane %v634, %v654
    %v656 = vlaneseq
    %v657 = vshrl.u32 %v656, 7
    %v658 = vsub.s32 5, %v657
    %v659 = vrot.slane %v634, %v658
    %v660 = vlaneseq
    %v661 = vshrl.u32 %v660, 7
    %v662 = vsub.s32 6, %v661
    %v663 = vrot.slane %v634, %v662
    %v927 = vunpack.c.l.b16 %v378
    %v928 = vunpack.c.h.b16 %v378
    %v929 = vunpack.c.l.b16 %v379
    %v930 = vunpack.c.h.b16 %v379
    %v931 = vunpack.c.l.b16 %v380
    %v932 = vunpack.c.h.b16 %v380
    %v933 = vunpack.c.l.b16 %v381
    %v934 = vunpack.c.l.b16 %v382
    %v935 = vunpack.c.h.b16 %v382
    %v936 = vunpack.c.l.b16 %v383
    %v937 = vunpack.c.h.b16 %v383
    %v938 = vunpack.c.l.b16 %v384
    %v939 = vunpack.c.h.b16 %v384
    %v940 = vunpack.c.l.b16 %v385
    %v941 = vunpack.c.l.b16 %v386
    %v942 = vunpack.c.h.b16 %v386
    %v943 = vunpack.c.l.b16 %v387
    %v944 = vunpack.c.h.b16 %v387
    %v945 = vunpack.c.l.b16 %v388
    %v946 = vunpack.c.h.b16 %v388
    %v947 = vunpack.c.l.b16 %v389
    %v948 = vunpack.c.l.b16 %v390
    %v949 = vunpack.c.h.b16 %v390
    %v950 = vunpack.c.l.b16 %v391
    %v951 = vunpack.c.h.b16 %v391
    %v952 = vunpack.c.l.b16 %v392
    %v953 = vunpack.c.h.b16 %v392
    %v954 = vunpack.c.l.b16 %v393
    %v955 = vunpack.c.l.b16 %v394
    %v956 = vunpack.c.h.b16 %v394
    %v957 = vunpack.c.l.b16 %v395
    %v958 = vunpack.c.h.b16 %v395
    %v959 = vunpack.c.l.b16 %v396
    %v960 = vunpack.c.h.b16 %v396
    %v961 = vunpack.c.l.b16 %v397
    %v962 = vunpack.c.l.b16 %v398
    %v963 = vunpack.c.h.b16 %v398
    %v964 = vunpack.c.l.b16 %v399
    %v965 = vunpack.c.h.b16 %v399
    %v966 = vunpack.c.l.b16 %v400
    %v967 = vunpack.c.h.b16 %v400
    %v968 = vunpack.c.l.b16 %v401
    %v969 = vunpack.c.l.b16 %v402
    %v970 = vunpack.c.h.b16 %v402
    %v971 = vunpack.c.l.b16 %v403
    %v972 = vunpack.c.h.b16 %v403
    %v973 = vunpack.c.l.b16 %v404
    %v974 = vunpack.c.h.b16 %v404
    %v975 = vunpack.c.l.b16 %v405
    %v976 = vunpack.c.l.b16 %v406
    %v977 = vunpack.c.h.b16 %v406
    %v978 = vunpack.c.l.b16 %v407
    %v979 = vunpack.c.h.b16 %v407
    %v980 = vunpack.c.l.b16 %v408
    %v981 = vunpack.c.h.b16 %v408
    %v982 = vunpack.c.l.b16 %v409
    %v983 = vunpack.c.l.b16 %v410
    %v984 = vunpack.c.h.b16 %v410
    %v985 = vunpack.c.l.b16 %v411
    %v986 = vunpack.c.h.b16 %v411
    %v987 = vunpack.c.l.b16 %v412
    %v988 = vunpack.c.h.b16 %v412
    %v989 = vunpack.c.l.b16 %v413
    %v990 = vunpack.c.l.b16 %v414
    %v991 = vunpack.c.h.b16 %v414
    %v992 = vunpack.c.l.b16 %v415
    %v993 = vunpack.c.h.b16 %v415
    %v994 = vunpack.c.l.b16 %v416
    %v995 = vunpack.c.h.b16 %v416
    %v996 = vunpack.c.l.b16 %v417
    %v997 = vunpack.c.l.b16 %v418
    %v998 = vunpack.c.h.b16 %v418
    %v999 = vunpack.c.l.b16 %v419
    %v1000 = vunpack.c.h.b16 %v419
    %v1001 = vunpack.c.l.b16 %v420
    %v1002 = vunpack.c.h.b16 %v420
    %v1003 = vunpack.c.l.b16 %v421
    %v1004 = vunpack.c.l.b16 %v422
    %v1005 = vunpack.c.h.b16 %v422
    %v1006 = vunpack.c.l.b16 %v423
    %v1007 = vunpack.c.h.b16 %v423
    %v1008 = vunpack.c.l.b16 %v424
    %v1009 = vunpack.c.h.b16 %v424
    %v1010 = vunpack.c.l.b16 %v425
    %v1011 = vunpack.c.l.b16 %v426
    %v1012 = vunpack.c.h.b16 %v426
    %v1013 = vunpack.c.l.b16 %v427
    %v1014 = vunpack.c.h.b16 %v427
    %v1015 = vunpack.c.l.b16 %v428
    %v1016 = vunpack.c.h.b16 %v428
    %v1017 = vunpack.c.l.b16 %v429
    %v1018 = vunpack.c.l.b16 %v430
    %v1019 = vunpack.c.h.b16 %v430
    %v1020 = vunpack.c.l.b16 %v431
    %v1021 = vunpack.c.h.b16 %v431
    %v1022 = vunpack.c.l.b16 %v432
    %v1023 = vunpack.c.h.b16 %v432
    %v1024 = vunpack.c.l.b16 %v433
    %v1025 = vunpack.c.l.b16 %v434
    %v1026 = vunpack.c.h.b16 %v434
    %v1027 = vunpack.c.l.b16 %v435
    %v1028 = vunpack.c.h.b16 %v435
    %v1029 = vunpack.c.l.b16 %v436
    %v1030 = vunpack.c.h.b16 %v436
    %v1031 = vunpack.c.l.b16 %v437
    %v1032 = vunpack.c.l.b16 %v438
    %v1033 = vunpack.c.h.b16 %v438
    %v1034 = vunpack.c.l.b16 %v439
    %v1035 = vunpack.c.h.b16 %v439
    %v1036 = vunpack.c.l.b16 %v440
    %v1037 = vunpack.c.h.b16 %v440
    %v1038 = vunpack.c.l.b16 %v441
    %v1039 = vunpack.c.l.b16 %v442
    %v1040 = vunpack.c.h.b16 %v442
    %v1041 = vunpack.c.l.b16 %v443
    %v1042 = vunpack.c.h.b16 %v443
    %v1043 = vunpack.c.l.b16 %v444
    %v1044 = vunpack.c.h.b16 %v444
    %v1045 = vunpack.c.l.b16 %v445
    %v1046 = vunpack.c.l.b16 %v446
    %v1047 = vunpack.c.h.b16 %v446
    %v1048 = vunpack.c.l.b16 %v447
    %v1049 = vunpack.c.h.b16 %v447
    %v1050 = vunpack.c.l.b16 %v448
    %v1051 = vunpack.c.h.b16 %v448
    %v1052 = vunpack.c.l.b16 %v449
    %v1053 = vunpack.c.l.b16 %v450
    %v1054 = vunpack.c.h.b16 %v450
    %v1055 = vunpack.c.l.b16 %v451
    %v1056 = vunpack.c.h.b16 %v451
    %v1057 = vunpack.c.l.b16 %v452
    %v1058 = vunpack.c.h.b16 %v452
    %v1059 = vunpack.c.l.b16 %v453
    %v1060 = vunpack.c.l.b16 %v454
    %v1061 = vunpack.c.h.b16 %v454
    %v1062 = vunpack.c.l.b16 %v455
    %v1063 = vunpack.c.h.b16 %v455
    %v1064 = vunpack.c.l.b16 %v456
    %v1065 = vunpack.c.h.b16 %v456
    %v1066 = vunpack.c.l.b16 %v457
    %v1067 = vunpack.c.l.b16 %v458
    %v1068 = vunpack.c.h.b16 %v458
    %v1069 = vunpack.c.l.b16 %v459
    %v1070 = vunpack.c.h.b16 %v459
    %v1071 = vunpack.c.l.b16 %v460
    %v1072 = vunpack.c.h.b16 %v460
    %v1073 = vunpack.c.l.b16 %v461
    %v1074 = vunpack.c.l.b16 %v462
    %v1075 = vunpack.c.h.b16 %v462
    %v1076 = vunpack.c.l.b16 %v463
    %v1077 = vunpack.c.h.b16 %v463
    %v1078 = vunpack.c.l.b16 %v464
    %v1079 = vunpack.c.h.b16 %v464
    %v1080 = vunpack.c.l.b16 %v465
    %v1081 = vunpack.c.l.b16 %v466
    %v1082 = vunpack.c.h.b16 %v466
    %v1083 = vunpack.c.l.b16 %v467
    %v1084 = vunpack.c.h.b16 %v467
    %v1085 = vunpack.c.l.b16 %v468
    %v1086 = vunpack.c.h.b16 %v468
    %v1087 = vunpack.c.l.b16 %v469
    %v1088 = vunpack.c.l.b16 %v470
    %v1089 = vunpack.c.h.b16 %v470
    %v1090 = vunpack.c.l.b16 %v471
    %v1091 = vunpack.c.h.b16 %v471
    %v1092 = vunpack.c.l.b16 %v472
    %v1093 = vunpack.c.h.b16 %v472
    %v1094 = vunpack.c.l.b16 %v473
    %v1095 = vunpack.c.l.b16 %v474
    %v1096 = vunpack.c.h.b16 %v474
    %v1097 = vunpack.c.l.b16 %v475
    %v1098 = vunpack.c.h.b16 %v475
    %v1099 = vunpack.c.l.b16 %v476
    %v1100 = vunpack.c.h.b16 %v476
    %v1101 = vunpack.c.l.b16 %v477
    %v1102 = vunpack.c.l.b16 %v478
    %v1103 = vunpack.c.h.b16 %v478
    %v1104 = vunpack.c.l.b16 %v479
    %v1105 = vunpack.c.h.b16 %v479
    %v1106 = vunpack.c.l.b16 %v480
    %v1107 = vunpack.c.h.b16 %v480
    %v1108 = vunpack.c.l.b16 %v481
    %v1109 = vunpack.c.l.b16 %v482
    %v1110 = vunpack.c.h.b16 %v482
    %v1111 = vunpack.c.l.b16 %v483
    %v1112 = vunpack.c.h.b16 %v483
    %v1113 = vunpack.c.l.b16 %v484
    %v1114 = vunpack.c.h.b16 %v484
    %v1115 = vunpack.c.l.b16 %v485
    %v1116 = vunpack.c.l.b16 %v486
    %v1117 = vunpack.c.h.b16 %v486
    %v1118 = vunpack.c.l.b16 %v487
    %v1119 = vunpack.c.h.b16 %v487
    %v1120 = vunpack.c.l.b16 %v488
    %v1121 = vunpack.c.h.b16 %v488
    %v1122 = vunpack.c.l.b16 %v489
    %v1123 = vunpack.c.l.b16 %v490
    %v1124 = vunpack.c.h.b16 %v490
    %v1125 = vunpack.c.l.b16 %v491
    %v1126 = vunpack.c.h.b16 %v491
    %v1127 = vunpack.c.l.b16 %v492
    %v1128 = vunpack.c.h.b16 %v492
    %v1129 = vunpack.c.l.b16 %v493
    %v1130 = vunpack.c.l.b16 %v494
    %v1131 = vunpack.c.h.b16 %v494
    %v1132 = vunpack.c.l.b16 %v495
    %v1133 = vunpack.c.h.b16 %v495
    %v1134 = vunpack.c.l.b16 %v496
    %v1135 = vunpack.c.h.b16 %v496
    %v1136 = vunpack.c.l.b16 %v497
    %v1137 = vunpack.c.l.b16 %v498
    %v1138 = vunpack.c.h.b16 %v498
    %v1139 = vunpack.c.l.b16 %v499
    %v1140 = vunpack.c.h.b16 %v499
    %v1141 = vunpack.c.l.b16 %v500
    %v1142 = vunpack.c.h.b16 %v500
    %v1143 = vunpack.c.l.b16 %v501
    %v1144 = vunpack.c.l.b16 %v502
    %v1145 = vunpack.c.h.b16 %v502
    %v1146 = vunpack.c.l.b16 %v503
    %v1147 = vunpack.c.h.b16 %v503
    %v1148 = vunpack.c.l.b16 %v504
    %v1149 = vunpack.c.h.b16 %v504
    %v1150 = vunpack.c.l.b16 %v505
    %v1151 = vunpack.c.l.b16 %v506
    %v1152 = vunpack.c.h.b16 %v506
    %v1153 = vunpack.c.l.b16 %v507
    %v1154 = vunpack.c.h.b16 %v507
    %v1155 = vunpack.c.l.b16 %v508
    %v1156 = vunpack.c.h.b16 %v508
    %v1157 = vunpack.c.l.b16 %v509
    %v1158 = vunpack.c.l.b16 %v510
    %v1159 = vunpack.c.h.b16 %v510
    %v1160 = vunpack.c.l.b16 %v511
    %v1161 = vunpack.c.h.b16 %v511
    %v1162 = vunpack.c.l.b16 %v512
    %v1163 = vunpack.c.h.b16 %v512
    %v1164 = vunpack.c.l.b16 %v513
    %v1165 = vunpack.c.l.b16 %v514
    %v1166 = vunpack.c.h.b16 %v514
    %v1167 = vunpack.c.l.b16 %v515
    %v1168 = vunpack.c.h.b16 %v515
    %v1169 = vunpack.c.l.b16 %v516
    %v1170 = vunpack.c.h.b16 %v516
    %v1171 = vunpack.c.l.b16 %v517
    %v1172 = vunpack.c.l.b16 %v518
    %v1173 = vunpack.c.h.b16 %v518
    %v1174 = vunpack.c.l.b16 %v519
    %v1175 = vunpack.c.h.b16 %v519
    %v1176 = vunpack.c.l.b16 %v520
    %v1177 = vunpack.c.h.b16 %v520
    %v1178 = vunpack.c.l.b16 %v521
    %v1179 = vunpack.c.l.b16 %v522
    %v1180 = vunpack.c.h.b16 %v522
    %v1181 = vunpack.c.l.b16 %v523
    %v1182 = vunpack.c.h.b16 %v523
    %v1183 = vunpack.c.l.b16 %v524
    %v1184 = vunpack.c.h.b16 %v524
    %v1185 = vunpack.c.l.b16 %v525
    %v1186 = vunpack.c.l.b16 %v526
    %v1187 = vunpack.c.h.b16 %v526
    %v1188 = vunpack.c.l.b16 %v527
    %v1189 = vunpack.c.h.b16 %v527
    %v1190 = vunpack.c.l.b16 %v528
    %v1191 = vunpack.c.h.b16 %v528
    %v1192 = vunpack.c.l.b16 %v529
    %v1193 = vunpack.c.l.b16 %v530
    %v1194 = vunpack.c.h.b16 %v530
    %v1195 = vunpack.c.l.b16 %v531
    %v1196 = vunpack.c.h.b16 %v531
    %v1197 = vunpack.c.l.b16 %v532
    %v1198 = vunpack.c.h.b16 %v532
    %v1199 = vunpack.c.l.b16 %v533
    %v1200 = vunpack.c.l.b16 %v534
    %v1201 = vunpack.c.h.b16 %v534
    %v1202 = vunpack.c.l.b16 %v535
    %v1203 = vunpack.c.h.b16 %v535
    %v1204 = vunpack.c.l.b16 %v536
    %v1205 = vunpack.c.h.b16 %v536
    %v1206 = vunpack.c.l.b16 %v537
    %v1207 = vunpack.c.l.b16 %v538
    %v1208 = vunpack.c.h.b16 %v538
    %v1209 = vunpack.c.l.b16 %v539
    %v1210 = vunpack.c.h.b16 %v539
    %v1211 = vunpack.c.l.b16 %v540
    %v1212 = vunpack.c.h.b16 %v540
    %v1213 = vunpack.c.l.b16 %v541
    %v1214 = vunpack.c.l.b16 %v542
    %v1215 = vunpack.c.h.b16 %v542
    %v1216 = vunpack.c.l.b16 %v543
    %v1217 = vunpack.c.h.b16 %v543
    %v1218 = vunpack.c.l.b16 %v544
    %v1219 = vunpack.c.h.b16 %v544
    %v1220 = vunpack.c.l.b16 %v545
    %v1221 = vunpack.c.l.b16 %v546
    %v1222 = vunpack.c.h.b16 %v546
    %v1223 = vunpack.c.l.b16 %v547
    %v1224 = vunpack.c.h.b16 %v547
    %v1225 = vunpack.c.l.b16 %v548
    %v1226 = vunpack.c.h.b16 %v548
    %v1227 = vunpack.c.l.b16 %v549
    %v1228 = vunpack.c.l.b16 %v550
    %v1229 = vunpack.c.h.b16 %v550
    %v1230 = vunpack.c.l.b16 %v551
    %v1231 = vunpack.c.h.b16 %v551
    %v1232 = vunpack.c.l.b16 %v552
    %v1233 = vunpack.c.h.b16 %v552
    %v1234 = vunpack.c.l.b16 %v553
    %v1235 = vunpack.c.l.b16 %v554
    %v1236 = vunpack.c.h.b16 %v554
    %v1237 = vunpack.c.l.b16 %v555
    %v1238 = vunpack.c.h.b16 %v555
    %v1239 = vunpack.c.l.b16 %v556
    %v1240 = vunpack.c.h.b16 %v556
    %v1241 = vunpack.c.l.b16 %v557
    %v1242 = vunpack.c.l.b16 %v558
    %v1243 = vunpack.c.h.b16 %v558
    %v1244 = vunpack.c.l.b16 %v559
    %v1245 = vunpack.c.h.b16 %v559
    %v1246 = vunpack.c.l.b16 %v560
    %v1247 = vunpack.c.h.b16 %v560
    %v1248 = vunpack.c.l.b16 %v561
    %v1249 = vunpack.c.l.b16 %v562
    %v1250 = vunpack.c.h.b16 %v562
    %v1251 = vunpack.c.l.b16 %v563
    %v1252 = vunpack.c.h.b16 %v563
    %v1253 = vunpack.c.l.b16 %v564
    %v1254 = vunpack.c.h.b16 %v564
    %v1255 = vunpack.c.l.b16 %v565
    %v1256 = vunpack.c.l.b16 %v566
    %v1257 = vunpack.c.h.b16 %v566
    %v1258 = vunpack.c.l.b16 %v567
    %v1259 = vunpack.c.h.b16 %v567
    %v1260 = vunpack.c.l.b16 %v568
    %v1261 = vunpack.c.h.b16 %v568
    %v1262 = vunpack.c.l.b16 %v569
    %v1263 = vunpack.c.l.b16 %v570
    %v1264 = vunpack.c.h.b16 %v570
    %v1265 = vunpack.c.l.b16 %v571
    %v1266 = vunpack.c.h.b16 %v571
    %v1267 = vunpack.c.l.b16 %v572
    %v1268 = vunpack.c.h.b16 %v572
    %v1269 = vunpack.c.l.b16 %v573
    %v1270 = vunpack.c.l.b16 %v574
    %v1271 = vunpack.c.h.b16 %v574
    %v1272 = vunpack.c.l.b16 %v575
    %v1273 = vunpack.c.h.b16 %v575
    %v1274 = vunpack.c.l.b16 %v576
    %v1275 = vunpack.c.h.b16 %v576
    %v1276 = vunpack.c.l.b16 %v577
    %v1277 = vunpack.c.l.b16 %v578
    %v1278 = vunpack.c.h.b16 %v578
    %v1279 = vunpack.c.l.b16 %v579
    %v1280 = vunpack.c.h.b16 %v579
    %v1281 = vunpack.c.l.b16 %v580
    %v1282 = vunpack.c.h.b16 %v580
    %v1283 = vunpack.c.l.b16 %v581
    %v1284 = vunpack.c.l.b16 %v582
    %v1285 = vunpack.c.h.b16 %v582
    %v1286 = vunpack.c.l.b16 %v583
    %v1287 = vunpack.c.h.b16 %v583
    %v1288 = vunpack.c.l.b16 %v584
    %v1289 = vunpack.c.h.b16 %v584
    %v1290 = vunpack.c.l.b16 %v585
    %v1291 = vunpack.c.l.b16 %v586
    %v1292 = vunpack.c.h.b16 %v586
    %v1293 = vunpack.c.l.b16 %v587
    %v1294 = vunpack.c.h.b16 %v587
    %v1295 = vunpack.c.l.b16 %v588
    %v1296 = vunpack.c.h.b16 %v588
    %v1297 = vunpack.c.l.b16 %v589
    %v1298 = vunpack.c.l.b16 %v590
    %v1299 = vunpack.c.h.b16 %v590
    %v1300 = vunpack.c.l.b16 %v591
    %v1301 = vunpack.c.h.b16 %v591
    %v1302 = vunpack.c.l.b16 %v592
    %v1303 = vunpack.c.h.b16 %v592
    %v1304 = vunpack.c.l.b16 %v593
    %v1305 = vunpack.c.l.b16 %v594
    %v1306 = vunpack.c.h.b16 %v594
    %v1307 = vunpack.c.l.b16 %v595
    %v1308 = vunpack.c.h.b16 %v595
    %v1309 = vunpack.c.l.b16 %v596
    %v1310 = vunpack.c.h.b16 %v596
    %v1311 = vunpack.c.l.b16 %v597
    %v1312 = vunpack.c.l.b16 %v598
    %v1313 = vunpack.c.h.b16 %v598
    %v1314 = vunpack.c.l.b16 %v599
    %v1315 = vunpack.c.h.b16 %v599
    %v1316 = vunpack.c.l.b16 %v600
    %v1317 = vunpack.c.h.b16 %v600
    %v1318 = vunpack.c.l.b16 %v601
    %v1319 = vunpack.c.l.b16 %v602
    %v1320 = vunpack.c.h.b16 %v602
    %v1321 = vunpack.c.l.b16 %v603
    %v1322 = vunpack.c.h.b16 %v603
    %v1323 = vunpack.c.l.b16 %v604
    %v1324 = vunpack.c.h.b16 %v604
    %v1325 = vunpack.c.l.b16 %v605
    %v1326 = vunpack.c.l.b16 %v606
    %v1327 = vunpack.c.h.b16 %v606
    %v1328 = vunpack.c.l.b16 %v607
    %v1329 = vunpack.c.h.b16 %v607
    %v1330 = vunpack.c.l.b16 %v608
    %v1331 = vunpack.c.h.b16 %v608
    %v1332 = vunpack.c.l.b16 %v609
    %v1333 = vunpack.c.l.b16 %v610
    %v1334 = vunpack.c.h.b16 %v610
    %v1335 = vunpack.c.l.b16 %v611
    %v1336 = vunpack.c.h.b16 %v611
    %v1337 = vunpack.c.l.b16 %v612
    %v1338 = vunpack.c.h.b16 %v612
    %v1339 = vunpack.c.l.b16 %v613
    %v1340 = vunpack.c.l.b16 %v614
    %v1341 = vunpack.c.h.b16 %v614
    %v1342 = vunpack.c.l.b16 %v615
    %v1343 = vunpack.c.h.b16 %v615
    %v1344 = vunpack.c.l.b16 %v616
    %v1345 = vunpack.c.h.b16 %v616
    %v1346 = vunpack.c.l.b16 %v617
    %v1347 = vunpack.c.l.b16 %v618
    %v1348 = vunpack.c.h.b16 %v618
    %v1349 = vunpack.c.l.b16 %v619
    %v1350 = vunpack.c.h.b16 %v619
    %v1351 = vunpack.c.l.b16 %v620
    %v1352 = vunpack.c.h.b16 %v620
    %v1353 = vunpack.c.l.b16 %v621
    %v1354 = vunpack.c.l.b16 %v622
    %v1355 = vunpack.c.h.b16 %v622
    %v1356 = vunpack.c.l.b16 %v623
    %v1357 = vunpack.c.h.b16 %v623
    %v1358 = vunpack.c.l.b16 %v624
    %v1359 = vunpack.c.h.b16 %v624
    %v1360 = vunpack.c.l.b16 %v625
    %v1361 = vunpack.c.l.b16 %v626
    %v1362 = vunpack.c.h.b16 %v626
    %v1363 = vunpack.c.l.b16 %v627
    %v1364 = vunpack.c.h.b16 %v627
    %v1365 = vunpack.c.l.b16 %v628
    %v1366 = vunpack.c.h.b16 %v628
    %v1367 = vunpack.c.l.b16 %v629
    %v1368 = vunpack.c.l.b16 %v630
    %v1369 = vunpack.c.h.b16 %v630
    %v1370 = vunpack.c.l.b16 %v631
    %v1371 = vunpack.c.h.b16 %v631
    %v1372 = vunpack.c.l.b16 %v632
    %v1373 = vunpack.c.h.b16 %v632
    %v1374 = vunpack.c.l.b16 %v633
    %v1375 = vpack.c.b16 %v934, %v927
    %v1376 = vpack.c.b16 %v935, %v928
    %v1377 = vpack.c.b16 %v936, %v929
    %v1378 = vpack.c.b16 %v937, %v930
    %v1379 = vpack.c.b16 %v938, %v931
    %v1380 = vpack.c.b16 %v939, %v932
    %v1381 = vpack.c.b16 %v940, %v933
    %v1382 = vpack.c.b16 %v948, %v941
    %v1383 = vpack.c.b16 %v949, %v942
    %v1384 = vpack.c.b16 %v950, %v943
    %v1385 = vpack.c.b16 %v951, %v944
    %v1386 = vpack.c.b16 %v952, %v945
    %v1387 = vpack.c.b16 %v953, %v946
    %v1388 = vpack.c.b16 %v954, %v947
    %v1389 = vpack.c.b16 %v962, %v955
    %v1390 = vpack.c.b16 %v963, %v956
    %v1391 = vpack.c.b16 %v964, %v957
    %v1392 = vpack.c.b16 %v965, %v958
    %v1393 = vpack.c.b16 %v966, %v959
    %v1394 = vpack.c.b16 %v967, %v960
    %v1395 = vpack.c.b16 %v968, %v961
    %v1396 = vpack.c.b16 %v976, %v969
    %v1397 = vpack.c.b16 %v977, %v970
    %v1398 = vpack.c.b16 %v978, %v971
    %v1399 = vpack.c.b16 %v979, %v972
    %v1400 = vpack.c.b16 %v980, %v973
    %v1401 = vpack.c.b16 %v981, %v974
    %v1402 = vpack.c.b16 %v982, %v975
    %v1403 = vpack.c.b16 %v990, %v983
    %v1404 = vpack.c.b16 %v991, %v984
    %v1405 = vpack.c.b16 %v992, %v985
    %v1406 = vpack.c.b16 %v993, %v986
    %v1407 = vpack.c.b16 %v994, %v987
    %v1408 = vpack.c.b16 %v995, %v988
    %v1409 = vpack.c.b16 %v996, %v989
    %v1410 = vpack.c.b16 %v1004, %v997
    %v1411 = vpack.c.b16 %v1005, %v998
    %v1412 = vpack.c.b16 %v1006, %v999
    %v1413 = vpack.c.b16 %v1007, %v1000
    %v1414 = vpack.c.b16 %v1008, %v1001
    %v1415 = vpack.c.b16 %v1009, %v1002
    %v1416 = vpack.c.b16 %v1010, %v1003
    %v1417 = vpack.c.b16 %v1018, %v1011
    %v1418 = vpack.c.b16 %v1019, %v1012
    %v1419 = vpack.c.b16 %v1020, %v1013
    %v1420 = vpack.c.b16 %v1021, %v1014
    %v1421 = vpack.c.b16 %v1022, %v1015
    %v1422 = vpack.c.b16 %v1023, %v1016
    %v1423 = vpack.c.b16 %v1024, %v1017
    %v1424 = vpack.c.b16 %v1032, %v1025
    %v1425 = vpack.c.b16 %v1033, %v1026
    %v1426 = vpack.c.b16 %v1034, %v1027
    %v1427 = vpack.c.b16 %v1035, %v1028
    %v1428 = vpack.c.b16 %v1036, %v1029
    %v1429 = vpack.c.b16 %v1037, %v1030
    %v1430 = vpack.c.b16 %v1038, %v1031
    %v1431 = vpack.c.b16 %v1046, %v1039
    %v1432 = vpack.c.b16 %v1047, %v1040
    %v1433 = vpack.c.b16 %v1048, %v1041
    %v1434 = vpack.c.b16 %v1049, %v1042
    %v1435 = vpack.c.b16 %v1050, %v1043
    %v1436 = vpack.c.b16 %v1051, %v1044
    %v1437 = vpack.c.b16 %v1052, %v1045
    %v1438 = vpack.c.b16 %v1060, %v1053
    %v1439 = vpack.c.b16 %v1061, %v1054
    %v1440 = vpack.c.b16 %v1062, %v1055
    %v1441 = vpack.c.b16 %v1063, %v1056
    %v1442 = vpack.c.b16 %v1064, %v1057
    %v1443 = vpack.c.b16 %v1065, %v1058
    %v1444 = vpack.c.b16 %v1066, %v1059
    %v1445 = vpack.c.b16 %v1074, %v1067
    %v1446 = vpack.c.b16 %v1075, %v1068
    %v1447 = vpack.c.b16 %v1076, %v1069
    %v1448 = vpack.c.b16 %v1077, %v1070
    %v1449 = vpack.c.b16 %v1078, %v1071
    %v1450 = vpack.c.b16 %v1079, %v1072
    %v1451 = vpack.c.b16 %v1080, %v1073
    %v1452 = vpack.c.b16 %v1088, %v1081
    %v1453 = vpack.c.b16 %v1089, %v1082
    %v1454 = vpack.c.b16 %v1090, %v1083
    %v1455 = vpack.c.b16 %v1091, %v1084
    %v1456 = vpack.c.b16 %v1092, %v1085
    %v1457 = vpack.c.b16 %v1093, %v1086
    %v1458 = vpack.c.b16 %v1094, %v1087
    %v1459 = vpack.c.b16 %v1102, %v1095
    %v1460 = vpack.c.b16 %v1103, %v1096
    %v1461 = vpack.c.b16 %v1104, %v1097
    %v1462 = vpack.c.b16 %v1105, %v1098
    %v1463 = vpack.c.b16 %v1106, %v1099
    %v1464 = vpack.c.b16 %v1107, %v1100
    %v1465 = vpack.c.b16 %v1108, %v1101
    %v1466 = vpack.c.b16 %v1116, %v1109
    %v1467 = vpack.c.b16 %v1117, %v1110
    %v1468 = vpack.c.b16 %v1118, %v1111
    %v1469 = vpack.c.b16 %v1119, %v1112
    %v1470 = vpack.c.b16 %v1120, %v1113
    %v1471 = vpack.c.b16 %v1121, %v1114
    %v1472 = vpack.c.b16 %v1122, %v1115
    %v1473 = vpack.c.b16 %v1130, %v1123
    %v1474 = vpack.c.b16 %v1131, %v1124
    %v1475 = vpack.c.b16 %v1132, %v1125
    %v1476 = vpack.c.b16 %v1133, %v1126
    %v1477 = vpack.c.b16 %v1134, %v1127
    %v1478 = vpack.c.b16 %v1135, %v1128
    %v1479 = vpack.c.b16 %v1136, %v1129
    %v1480 = vpack.c.b16 %v1144, %v1137
    %v1481 = vpack.c.b16 %v1145, %v1138
    %v1482 = vpack.c.b16 %v1146, %v1139
    %v1483 = vpack.c.b16 %v1147, %v1140
    %v1484 = vpack.c.b16 %v1148, %v1141
    %v1485 = vpack.c.b16 %v1149, %v1142
    %v1486 = vpack.c.b16 %v1150, %v1143
    %v1487 = vpack.c.b16 %v1158, %v1151
    %v1488 = vpack.c.b16 %v1159, %v1152
    %v1489 = vpack.c.b16 %v1160, %v1153
    %v1490 = vpack.c.b16 %v1161, %v1154
    %v1491 = vpack.c.b16 %v1162, %v1155
    %v1492 = vpack.c.b16 %v1163, %v1156
    %v1493 = vpack.c.b16 %v1164, %v1157
    %v1494 = vpack.c.b16 %v1172, %v1165
    %v1495 = vpack.c.b16 %v1173, %v1166
    %v1496 = vpack.c.b16 %v1174, %v1167
    %v1497 = vpack.c.b16 %v1175, %v1168
    %v1498 = vpack.c.b16 %v1176, %v1169
    %v1499 = vpack.c.b16 %v1177, %v1170
    %v1500 = vpack.c.b16 %v1178, %v1171
    %v1501 = vpack.c.b16 %v1186, %v1179
    %v1502 = vpack.c.b16 %v1187, %v1180
    %v1503 = vpack.c.b16 %v1188, %v1181
    %v1504 = vpack.c.b16 %v1189, %v1182
    %v1505 = vpack.c.b16 %v1190, %v1183
    %v1506 = vpack.c.b16 %v1191, %v1184
    %v1507 = vpack.c.b16 %v1192, %v1185
    %v1508 = vpack.c.b16 %v1200, %v1193
    %v1509 = vpack.c.b16 %v1201, %v1194
    %v1510 = vpack.c.b16 %v1202, %v1195
    %v1511 = vpack.c.b16 %v1203, %v1196
    %v1512 = vpack.c.b16 %v1204, %v1197
    %v1513 = vpack.c.b16 %v1205, %v1198
    %v1514 = vpack.c.b16 %v1206, %v1199
    %v1515 = vpack.c.b16 %v1214, %v1207
    %v1516 = vpack.c.b16 %v1215, %v1208
    %v1517 = vpack.c.b16 %v1216, %v1209
    %v1518 = vpack.c.b16 %v1217, %v1210
    %v1519 = vpack.c.b16 %v1218, %v1211
    %v1520 = vpack.c.b16 %v1219, %v1212
    %v1521 = vpack.c.b16 %v1220, %v1213
    %v1522 = vpack.c.b16 %v1228, %v1221
    %v1523 = vpack.c.b16 %v1229, %v1222
    %v1524 = vpack.c.b16 %v1230, %v1223
    %v1525 = vpack.c.b16 %v1231, %v1224
    %v1526 = vpack.c.b16 %v1232, %v1225
    %v1527 = vpack.c.b16 %v1233, %v1226
    %v1528 = vpack.c.b16 %v1234, %v1227
    %v1529 = vpack.c.b16 %v1242, %v1235
    %v1530 = vpack.c.b16 %v1243, %v1236
    %v1531 = vpack.c.b16 %v1244, %v1237
    %v1532 = vpack.c.b16 %v1245, %v1238
    %v1533 = vpack.c.b16 %v1246, %v1239
    %v1534 = vpack.c.b16 %v1247, %v1240
    %v1535 = vpack.c.b16 %v1248, %v1241
    %v1536 = vpack.c.b16 %v1256, %v1249
    %v1537 = vpack.c.b16 %v1257, %v1250
    %v1538 = vpack.c.b16 %v1258, %v1251
    %v1539 = vpack.c.b16 %v1259, %v1252
    %v1540 = vpack.c.b16 %v1260, %v1253
    %v1541 = vpack.c.b16 %v1261, %v1254
    %v1542 = vpack.c.b16 %v1262, %v1255
    %v1543 = vpack.c.b16 %v1270, %v1263
    %v1544 = vpack.c.b16 %v1271, %v1264
    %v1545 = vpack.c.b16 %v1272, %v1265
    %v1546 = vpack.c.b16 %v1273, %v1266
    %v1547 = vpack.c.b16 %v1274, %v1267
    %v1548 = vpack.c.b16 %v1275, %v1268
    %v1549 = vpack.c.b16 %v1276, %v1269
    %v1550 = vpack.c.b16 %v1284, %v1277
    %v1551 = vpack.c.b16 %v1285, %v1278
    %v1552 = vpack.c.b16 %v1286, %v1279
    %v1553 = vpack.c.b16 %v1287, %v1280
    %v1554 = vpack.c.b16 %v1288, %v1281
    %v1555 = vpack.c.b16 %v1289, %v1282
    %v1556 = vpack.c.b16 %v1290, %v1283
    %v1557 = vpack.c.b16 %v1298, %v1291
    %v1558 = vpack.c.b16 %v1299, %v1292
    %v1559 = vpack.c.b16 %v1300, %v1293
    %v1560 = vpack.c.b16 %v1301, %v1294
    %v1561 = vpack.c.b16 %v1302, %v1295
    %v1562 = vpack.c.b16 %v1303, %v1296
    %v1563 = vpack.c.b16 %v1304, %v1297
    %v1564 = vpack.c.b16 %v1312, %v1305
    %v1565 = vpack.c.b16 %v1313, %v1306
    %v1566 = vpack.c.b16 %v1314, %v1307
    %v1567 = vpack.c.b16 %v1315, %v1308
    %v1568 = vpack.c.b16 %v1316, %v1309
    %v1569 = vpack.c.b16 %v1317, %v1310
    %v1570 = vpack.c.b16 %v1318, %v1311
    %v1571 = vpack.c.b16 %v1326, %v1319
    %v1572 = vpack.c.b16 %v1327, %v1320
    %v1573 = vpack.c.b16 %v1328, %v1321
    %v1574 = vpack.c.b16 %v1329, %v1322
    %v1575 = vpack.c.b16 %v1330, %v1323
    %v1576 = vpack.c.b16 %v1331, %v1324
    %v1577 = vpack.c.b16 %v1332, %v1325
    %v1578 = vpack.c.b16 %v1340, %v1333
    %v1579 = vpack.c.b16 %v1341, %v1334
    %v1580 = vpack.c.b16 %v1342, %v1335
    %v1581 = vpack.c.b16 %v1343, %v1336
    %v1582 = vpack.c.b16 %v1344, %v1337
    %v1583 = vpack.c.b16 %v1345, %v1338
    %v1584 = vpack.c.b16 %v1346, %v1339
    %v1585 = vpack.c.b16 %v1354, %v1347
    %v1586 = vpack.c.b16 %v1355, %v1348
    %v1587 = vpack.c.b16 %v1356, %v1349
    %v1588 = vpack.c.b16 %v1357, %v1350
    %v1589 = vpack.c.b16 %v1358, %v1351
    %v1590 = vpack.c.b16 %v1359, %v1352
    %v1591 = vpack.c.b16 %v1360, %v1353
    %v1592 = vpack.c.b16 %v1368, %v1361
    %v1593 = vpack.c.b16 %v1369, %v1362
    %v1594 = vpack.c.b16 %v1370, %v1363
    %v1595 = vpack.c.b16 %v1371, %v1364
    %v1596 = vpack.c.b16 %v1372, %v1365
    %v1597 = vpack.c.b16 %v1373, %v1366
    %v1598 = vpack.c.b16 %v1374, %v1367
    %1823 = vmatprep.subr.bf16.mxu0 %v1425
    %1824 = vmatpush1.bf16.msra.mxu0 %v1424
    %1825 = vmatprep.subr.bf16.mxu0 %v1418
    %1826 = vmatpush1.bf16.msra.mxu0 %v1417
    %1827 = vmatprep.subr.bf16.mxu0 %v1411
    %1828 = vmatpush1.bf16.msra.mxu0 %v1410
    %1829 = vmatprep.subr.bf16.mxu0 %v1404
    %1830 = vmatpush1.bf16.msra.mxu0 %v1403
    %1831 = vmatprep.subr.bf16.mxu0 %v1397
    %1832 = vmatpush1.bf16.msra.mxu0 %v1396
    %1833 = vmatprep.subr.bf16.mxu0 %v1390
    %1834 = vmatpush1.bf16.msra.mxu0 %v1389
    %1835 = vmatprep.subr.bf16.mxu0 %v1383
    %1836 = vmatpush1.bf16.msra.mxu0 %v1382
    %1837 = vmatprep.subr.bf16.mxu0 %v1376
    %1838 = vmatpush1.bf16.msra.mxu0 %v1375
    %1839 = vmatprep.subr.bf16.mxu0 %v1481
    %1840 = vmatpush2.bf16.msra.mxu0 %v1480
    %1841 = vmatprep.subr.bf16.mxu0 %v1474
    %1842 = vmatpush2.bf16.msra.mxu0 %v1473
    %1843 = vmatprep.subr.bf16.mxu0 %v1467
    %1844 = vmatpush2.bf16.msra.mxu0 %v1466
    %1845 = vmatprep.subr.bf16.mxu0 %v1460
    %1846 = vmatpush2.bf16.msra.mxu0 %v1459
    %1847 = vmatprep.subr.bf16.mxu0 %v1453
    %1848 = vmatpush2.bf16.msra.mxu0 %v1452
    %1849 = vmatprep.subr.bf16.mxu0 %v1446
    %1850 = vmatpush2.bf16.msra.mxu0 %v1445
    %1851 = vmatprep.subr.bf16.mxu0 %v1439
    %1852 = vmatpush2.bf16.msra.mxu0 %v1438
    %1853 = vmatprep.subr.bf16.mxu0 %v1432
    %1854 = vmatpush2.bf16.msra.mxu0 %v1431
    %1855 = vmatprep.mubr.bf16.mxu0 %v375
    %1856 = vmatmul.mubr.bf16.gmra.mxu0 %v374
    %v1857 = vpop.f32.mrf.mxu0
    %v1858 = vadd.f32 %v639, %v1857
    %v1859 = vpop.f32.mrf.mxu0
    %v1860 = vadd.f32 %v643, %v1859
    %v1861 = vpop.f32.mrf.mxu0
    %v1862 = vpop.f32.mrf.mxu0
    %1863 = vdwg.mxu0
    %1864 = vmatprep.subr.bf16.mxu0 %v1537
    %1865 = vmatpush1.bf16.msra.mxu0 %v1536
    %1866 = vmatprep.subr.bf16.mxu0 %v1530
    %1867 = vmatpush1.bf16.msra.mxu0 %v1529
    %1868 = vmatprep.subr.bf16.mxu0 %v1523
    %1869 = vmatpush1.bf16.msra.mxu0 %v1522
    %1870 = vmatprep.subr.bf16.mxu0 %v1516
    %1871 = vmatpush1.bf16.msra.mxu0 %v1515
    %1872 = vmatprep.subr.bf16.mxu0 %v1509
    %1873 = vmatpush1.bf16.msra.mxu0 %v1508
    %1874 = vmatprep.subr.bf16.mxu0 %v1502
    %1875 = vmatpush1.bf16.msra.mxu0 %v1501
    %1876 = vmatprep.subr.bf16.mxu0 %v1495
    %1877 = vmatpush1.bf16.msra.mxu0 %v1494
    %1878 = vmatprep.subr.bf16.mxu0 %v1488
    %1879 = vmatpush1.bf16.msra.mxu0 %v1487
    %1880 = vmatprep.subr.bf16.mxu0 %v1593
    %1881 = vmatpush2.bf16.msra.mxu0 %v1592
    %1882 = vmatprep.subr.bf16.mxu0 %v1586
    %1883 = vmatpush2.bf16.msra.mxu0 %v1585
    %1884 = vmatprep.subr.bf16.mxu0 %v1579
    %1885 = vmatpush2.bf16.msra.mxu0 %v1578
    %1886 = vmatprep.subr.bf16.mxu0 %v1572
    %1887 = vmatpush2.bf16.msra.mxu0 %v1571
    %1888 = vmatprep.subr.bf16.mxu0 %v1565
    %1889 = vmatpush2.bf16.msra.mxu0 %v1564
    %1890 = vmatprep.subr.bf16.mxu0 %v1558
    %1891 = vmatpush2.bf16.msra.mxu0 %v1557
    %1892 = vmatprep.subr.bf16.mxu0 %v1551
    %1893 = vmatpush2.bf16.msra.mxu0 %v1550
    %1894 = vmatprep.subr.bf16.mxu0 %v1544
    %1895 = vmatpush2.bf16.msra.mxu0 %v1543
    %1896 = vmatprep.mubr.bf16.mxu0 %v377
    %1897 = vmatmul.mubr.bf16.gmra.mxu0 %v376
    %v1898 = vpop.f32.mrf.mxu0
    %v1899 = vadd.f32 %v1858, %v1898
    %v1900 = vpop.f32.mrf.mxu0
    %v1901 = vadd.f32 %v1860, %v1900
    %v1902 = vpop.f32.mrf.mxu0
    %v1903 = vpop.f32.mrf.mxu0
    %1904 = vdwg.mxu0
    %1905 = vmatprep.subr.bf16.mxu0 %v1427
    %1906 = vmatpush1.bf16.msra.mxu0 %v1426
    %1907 = vmatprep.subr.bf16.mxu0 %v1420
    %1908 = vmatpush1.bf16.msra.mxu0 %v1419
    %1909 = vmatprep.subr.bf16.mxu0 %v1413
    %1910 = vmatpush1.bf16.msra.mxu0 %v1412
    %1911 = vmatprep.subr.bf16.mxu0 %v1406
    %1912 = vmatpush1.bf16.msra.mxu0 %v1405
    %1913 = vmatprep.subr.bf16.mxu0 %v1399
    %1914 = vmatpush1.bf16.msra.mxu0 %v1398
    %1915 = vmatprep.subr.bf16.mxu0 %v1392
    %1916 = vmatpush1.bf16.msra.mxu0 %v1391
    %1917 = vmatprep.subr.bf16.mxu0 %v1385
    %1918 = vmatpush1.bf16.msra.mxu0 %v1384
    %1919 = vmatprep.subr.bf16.mxu0 %v1378
    %1920 = vmatpush1.bf16.msra.mxu0 %v1377
    %1921 = vmatprep.subr.bf16.mxu0 %v1483
    %1922 = vmatpush2.bf16.msra.mxu0 %v1482
    %1923 = vmatprep.subr.bf16.mxu0 %v1476
    %1924 = vmatpush2.bf16.msra.mxu0 %v1475
    %1925 = vmatprep.subr.bf16.mxu0 %v1469
    %1926 = vmatpush2.bf16.msra.mxu0 %v1468
    %1927 = vmatprep.subr.bf16.mxu0 %v1462
    %1928 = vmatpush2.bf16.msra.mxu0 %v1461
    %1929 = vmatprep.subr.bf16.mxu0 %v1455
    %1930 = vmatpush2.bf16.msra.mxu0 %v1454
    %1931 = vmatprep.subr.bf16.mxu0 %v1448
    %1932 = vmatpush2.bf16.msra.mxu0 %v1447
    %1933 = vmatprep.subr.bf16.mxu0 %v1441
    %1934 = vmatpush2.bf16.msra.mxu0 %v1440
    %1935 = vmatprep.subr.bf16.mxu0 %v1434
    %1936 = vmatpush2.bf16.msra.mxu0 %v1433
    %1937 = vmatprep.mubr.bf16.mxu0 %v375
    %1938 = vmatmul.mubr.bf16.gmra.mxu0 %v374
    %v1939 = vpop.f32.mrf.mxu0
    %v1940 = vadd.f32 %v647, %v1939
    %v1941 = vpop.f32.mrf.mxu0
    %v1942 = vadd.f32 %v651, %v1941
    %v1943 = vpop.f32.mrf.mxu0
    %v1944 = vpop.f32.mrf.mxu0
    %1945 = vdwg.mxu0
    %1946 = vmatprep.subr.bf16.mxu0 %v1539
    %1947 = vmatpush1.bf16.msra.mxu0 %v1538
    %1948 = vmatprep.subr.bf16.mxu0 %v1532
    %1949 = vmatpush1.bf16.msra.mxu0 %v1531
    %1950 = vmatprep.subr.bf16.mxu0 %v1525
    %1951 = vmatpush1.bf16.msra.mxu0 %v1524
    %1952 = vmatprep.subr.bf16.mxu0 %v1518
    %1953 = vmatpush1.bf16.msra.mxu0 %v1517
    %1954 = vmatprep.subr.bf16.mxu0 %v1511
    %1955 = vmatpush1.bf16.msra.mxu0 %v1510
    %1956 = vmatprep.subr.bf16.mxu0 %v1504
    %1957 = vmatpush1.bf16.msra.mxu0 %v1503
    %1958 = vmatprep.subr.bf16.mxu0 %v1497
    %1959 = vmatpush1.bf16.msra.mxu0 %v1496
    %1960 = vmatprep.subr.bf16.mxu0 %v1490
    %1961 = vmatpush1.bf16.msra.mxu0 %v1489
    %1962 = vmatprep.subr.bf16.mxu0 %v1595
    %1963 = vmatpush2.bf16.msra.mxu0 %v1594
    %1964 = vmatprep.subr.bf16.mxu0 %v1588
    %1965 = vmatpush2.bf16.msra.mxu0 %v1587
    %1966 = vmatprep.subr.bf16.mxu0 %v1581
    %1967 = vmatpush2.bf16.msra.mxu0 %v1580
    %1968 = vmatprep.subr.bf16.mxu0 %v1574
    %1969 = vmatpush2.bf16.msra.mxu0 %v1573
    %1970 = vmatprep.subr.bf16.mxu0 %v1567
    %1971 = vmatpush2.bf16.msra.mxu0 %v1566
    %1972 = vmatprep.subr.bf16.mxu0 %v1560
    %1973 = vmatpush2.bf16.msra.mxu0 %v1559
    %1974 = vmatprep.subr.bf16.mxu0 %v1553
    %1975 = vmatpush2.bf16.msra.mxu0 %v1552
    %1976 = vmatprep.subr.bf16.mxu0 %v1546
    %1977 = vmatpush2.bf16.msra.mxu0 %v1545
    %1978 = vmatprep.mubr.bf16.mxu0 %v377
    %1979 = vmatmul.mubr.bf16.gmra.mxu0 %v376
    %v1980 = vpop.f32.mrf.mxu0
    %v1981 = vadd.f32 %v1940, %v1980
    %v1982 = vpop.f32.mrf.mxu0
    %v1983 = vadd.f32 %v1942, %v1982
    %v1984 = vpop.f32.mrf.mxu0
    %v1985 = vpop.f32.mrf.mxu0
    %1986 = vdwg.mxu0
    %1987 = vmatprep.subr.bf16.mxu0 %v1429
    %1988 = vmatpush1.bf16.msra.mxu0 %v1428
    %1989 = vmatprep.subr.bf16.mxu0 %v1422
    %1990 = vmatpush1.bf16.msra.mxu0 %v1421
    %1991 = vmatprep.subr.bf16.mxu0 %v1415
    %1992 = vmatpush1.bf16.msra.mxu0 %v1414
    %1993 = vmatprep.subr.bf16.mxu0 %v1408
    %1994 = vmatpush1.bf16.msra.mxu0 %v1407
    %1995 = vmatprep.subr.bf16.mxu0 %v1401
    %1996 = vmatpush1.bf16.msra.mxu0 %v1400
    %1997 = vmatprep.subr.bf16.mxu0 %v1394
    %1998 = vmatpush1.bf16.msra.mxu0 %v1393
    %1999 = vmatprep.subr.bf16.mxu0 %v1387
    %2000 = vmatpush1.bf16.msra.mxu0 %v1386
    %2001 = vmatprep.subr.bf16.mxu0 %v1380
    %2002 = vmatpush1.bf16.msra.mxu0 %v1379
    %2003 = vmatprep.subr.bf16.mxu0 %v1485
    %2004 = vmatpush2.bf16.msra.mxu0 %v1484
    %2005 = vmatprep.subr.bf16.mxu0 %v1478
    %2006 = vmatpush2.bf16.msra.mxu0 %v1477
    %2007 = vmatprep.subr.bf16.mxu0 %v1471
    %2008 = vmatpush2.bf16.msra.mxu0 %v1470
    %2009 = vmatprep.subr.bf16.mxu0 %v1464
    %2010 = vmatpush2.bf16.msra.mxu0 %v1463
    %2011 = vmatprep.subr.bf16.mxu0 %v1457
    %2012 = vmatpush2.bf16.msra.mxu0 %v1456
    %2013 = vmatprep.subr.bf16.mxu0 %v1450
    %2014 = vmatpush2.bf16.msra.mxu0 %v1449
    %2015 = vmatprep.subr.bf16.mxu0 %v1443
    %2016 = vmatpush2.bf16.msra.mxu0 %v1442
    %2017 = vmatprep.subr.bf16.mxu0 %v1436
    %2018 = vmatpush2.bf16.msra.mxu0 %v1435
    %2019 = vmatprep.mubr.bf16.mxu0 %v375
    %2020 = vmatmul.mubr.bf16.gmra.mxu0 %v374
    %v2021 = vpop.f32.mrf.mxu0
    %v2022 = vadd.f32 %v655, %v2021
    %v2023 = vpop.f32.mrf.mxu0
    %v2024 = vadd.f32 %v659, %v2023
    %v2025 = vpop.f32.mrf.mxu0
    %v2026 = vpop.f32.mrf.mxu0
    %2027 = vdwg.mxu0
    %2028 = vmatprep.subr.bf16.mxu0 %v1541
    %2029 = vmatpush1.bf16.msra.mxu0 %v1540
    %2030 = vmatprep.subr.bf16.mxu0 %v1534
    %2031 = vmatpush1.bf16.msra.mxu0 %v1533
    %2032 = vmatprep.subr.bf16.mxu0 %v1527
    %2033 = vmatpush1.bf16.msra.mxu0 %v1526
    %2034 = vmatprep.subr.bf16.mxu0 %v1520
    %2035 = vmatpush1.bf16.msra.mxu0 %v1519
    %2036 = vmatprep.subr.bf16.mxu0 %v1513
    %2037 = vmatpush1.bf16.msra.mxu0 %v1512
    %2038 = vmatprep.subr.bf16.mxu0 %v1506
    %2039 = vmatpush1.bf16.msra.mxu0 %v1505
    %2040 = vmatprep.subr.bf16.mxu0 %v1499
    %2041 = vmatpush1.bf16.msra.mxu0 %v1498
    %2042 = vmatprep.subr.bf16.mxu0 %v1492
    %2043 = vmatpush1.bf16.msra.mxu0 %v1491
    %2044 = vmatprep.subr.bf16.mxu0 %v1597
    %2045 = vmatpush2.bf16.msra.mxu0 %v1596
    %2046 = vmatprep.subr.bf16.mxu0 %v1590
    %2047 = vmatpush2.bf16.msra.mxu0 %v1589
    %2048 = vmatprep.subr.bf16.mxu0 %v1583
    %2049 = vmatpush2.bf16.msra.mxu0 %v1582
    %2050 = vmatprep.subr.bf16.mxu0 %v1576
    %2051 = vmatpush2.bf16.msra.mxu0 %v1575
    %2052 = vmatprep.subr.bf16.mxu0 %v1569
    %2053 = vmatpush2.bf16.msra.mxu0 %v1568
    %2054 = vmatprep.subr.bf16.mxu0 %v1562
    %2055 = vmatpush2.bf16.msra.mxu0 %v1561
    %2056 = vmatprep.subr.bf16.mxu0 %v1555
    %2057 = vmatpush2.bf16.msra.mxu0 %v1554
    %2058 = vmatprep.subr.bf16.mxu0 %v1548
    %2059 = vmatpush2.bf16.msra.mxu0 %v1547
    %2060 = vmatprep.mubr.bf16.mxu0 %v377
    %2061 = vmatmul.mubr.bf16.gmra.mxu0 %v376
    %v2062 = vpop.f32.mrf.mxu0
    %v2063 = vadd.f32 %v2022, %v2062
    %v2064 = vpop.f32.mrf.mxu0
    %v2065 = vadd.f32 %v2024, %v2064
    %v2066 = vpop.f32.mrf.mxu0
    %v2067 = vpop.f32.mrf.mxu0
    %2068 = vdwg.mxu0
    %2069 = vmatprep.subr.bf16.mxu0 0
    %2070 = vmatpush1.bf16.msra.mxu0 %v1430
    %2071 = vmatprep.subr.bf16.mxu0 0
    %2072 = vmatpush1.bf16.msra.mxu0 %v1423
    %2073 = vmatprep.subr.bf16.mxu0 0
    %2074 = vmatpush1.bf16.msra.mxu0 %v1416
    %2075 = vmatprep.subr.bf16.mxu0 0
    %2076 = vmatpush1.bf16.msra.mxu0 %v1409
    %2077 = vmatprep.subr.bf16.mxu0 0
    %2078 = vmatpush1.bf16.msra.mxu0 %v1402
    %2079 = vmatprep.subr.bf16.mxu0 0
    %2080 = vmatpush1.bf16.msra.mxu0 %v1395
    %2081 = vmatprep.subr.bf16.mxu0 0
    %2082 = vmatpush1.bf16.msra.mxu0 %v1388
    %2083 = vmatprep.subr.bf16.mxu0 0
    %2084 = vmatpush1.bf16.msra.mxu0 %v1381
    %2085 = vmatprep.subr.bf16.mxu0 0
    %2086 = vmatpush2.bf16.msra.mxu0 %v1486
    %2087 = vmatprep.subr.bf16.mxu0 0
    %2088 = vmatpush2.bf16.msra.mxu0 %v1479
    %2089 = vmatprep.subr.bf16.mxu0 0
    %2090 = vmatpush2.bf16.msra.mxu0 %v1472
    %2091 = vmatprep.subr.bf16.mxu0 0
    %2092 = vmatpush2.bf16.msra.mxu0 %v1465
    %2093 = vmatprep.subr.bf16.mxu0 0
    %2094 = vmatpush2.bf16.msra.mxu0 %v1458
    %2095 = vmatprep.subr.bf16.mxu0 0
    %2096 = vmatpush2.bf16.msra.mxu0 %v1451
    %2097 = vmatprep.subr.bf16.mxu0 0
    %2098 = vmatpush2.bf16.msra.mxu0 %v1444
    %2099 = vmatprep.subr.bf16.mxu0 0
    %2100 = vmatpush2.bf16.msra.mxu0 %v1437
    %2101 = vmatprep.mubr.bf16.mxu0 %v375
    %2102 = vmatmul.mubr.bf16.gmra.mxu0 %v374
    %v2103 = vpop.f32.mrf.mxu0
    %v2104 = vadd.f32 %v663, %v2103
    %v2105 = vpop.f32.mrf.mxu0
    %v2106 = vpop.f32.mrf.mxu0
    %v2107 = vpop.f32.mrf.mxu0
    %2108 = vdwg.mxu0
    %2109 = vmatprep.subr.bf16.mxu0 0
    %2110 = vmatpush1.bf16.msra.mxu0 %v1542
    %2111 = vmatprep.subr.bf16.mxu0 0
    %2112 = vmatpush1.bf16.msra.mxu0 %v1535
    %2113 = vmatprep.subr.bf16.mxu0 0
    %2114 = vmatpush1.bf16.msra.mxu0 %v1528
    %2115 = vmatprep.subr.bf16.mxu0 0
    %2116 = vmatpush1.bf16.msra.mxu0 %v1521
    %2117 = vmatprep.subr.bf16.mxu0 0
    %2118 = vmatpush1.bf16.msra.mxu0 %v1514
    %2119 = vmatprep.subr.bf16.mxu0 0
    %2120 = vmatpush1.bf16.msra.mxu0 %v1507
    %2121 = vmatprep.subr.bf16.mxu0 0
    %2122 = vmatpush1.bf16.msra.mxu0 %v1500
    %2123 = vmatprep.subr.bf16.mxu0 0
    %2124 = vmatpush1.bf16.msra.mxu0 %v1493
    %2125 = vmatprep.subr.bf16.mxu0 0
    %2126 = vmatpush2.bf16.msra.mxu0 %v1598
    %2127 = vmatprep.subr.bf16.mxu0 0
    %2128 = vmatpush2.bf16.msra.mxu0 %v1591
    %2129 = vmatprep.subr.bf16.mxu0 0
    %2130 = vmatpush2.bf16.msra.mxu0 %v1584
    %2131 = vmatprep.subr.bf16.mxu0 0
    %2132 = vmatpush2.bf16.msra.mxu0 %v1577
    %2133 = vmatprep.subr.bf16.mxu0 0
    %2134 = vmatpush2.bf16.msra.mxu0 %v1570
    %2135 = vmatprep.subr.bf16.mxu0 0
    %2136 = vmatpush2.bf16.msra.mxu0 %v1563
    %2137 = vmatprep.subr.bf16.mxu0 0
    %2138 = vmatpush2.bf16.msra.mxu0 %v1556
    %2139 = vmatprep.subr.bf16.mxu0 0
    %2140 = vmatpush2.bf16.msra.mxu0 %v1549
    %2141 = vmatprep.mubr.bf16.mxu0 %v377
    %2142 = vmatmul.mubr.bf16.gmra.mxu0 %v376
    %v2143 = vpop.f32.mrf.mxu0
    %v2144 = vadd.f32 %v2104, %v2143
    %v2145 = vpop.f32.mrf.mxu0
    %v2146 = vpop.f32.mrf.mxu0
    %v2147 = vpop.f32.mrf.mxu0
    %2148 = vdwg.mxu0
    %v2149 = vxor.u32 %v1899, 2147483648
    %v2150 = vxor.u32 %v1901, 2147483648
    %v2151 = vxor.u32 %v1981, 2147483648
    %v2152 = vxor.u32 %v1983, 2147483648
    %v2153 = vxor.u32 %v2063, 2147483648
    %v2154 = vxor.u32 %v2065, 2147483648
    %v2155 = vxor.u32 %v2144, 2147483648
    %v2156 = vmul.f32 %v2149, 1.442695
    %v2157 = vpow.pop %v2156
    %v2158 = vmul.f32 %v2150, 1.442695
    %v2159 = vpow.pop %v2158
    %v2160 = vmul.f32 %v2151, 1.442695
    %v2161 = vpow.pop %v2160
    %v2162 = vmul.f32 %v2152, 1.442695
    %v2163 = vpow.pop %v2162
    %v2164 = vmul.f32 %v2153, 1.442695
    %v2165 = vpow.pop %v2164
    %v2166 = vmul.f32 %v2154, 1.442695
    %v2167 = vpow.pop %v2166
    %v2168 = vmul.f32 %v2155, 1.442695
    %v2169 = vpow.pop %v2168
    %v2170 = vadd.f32 %v2157, 1.0
    %v2171 = vadd.f32 %v2159, 1.0
    %v2172 = vadd.f32 %v2161, 1.0
    %v2173 = vadd.f32 %v2163, 1.0
    %v2174 = vadd.f32 %v2165, 1.0
    %v2175 = vadd.f32 %v2167, 1.0
    %v2176 = vadd.f32 %v2169, 1.0
    %v2177 = vrcp.pop %v2170
    %v2178 = vmul.f32 1.0, %v2177
    %v2179 = vrcp.pop %v2171
    %v2180 = vmul.f32 1.0, %v2179
    %v2181 = vrcp.pop %v2172
    %v2182 = vmul.f32 1.0, %v2181
    %v2183 = vrcp.pop %v2173
    %v2184 = vmul.f32 1.0, %v2183
    %v2185 = vrcp.pop %v2174
    %v2186 = vmul.f32 1.0, %v2185
    %v2187 = vrcp.pop %v2175
    %v2188 = vmul.f32 1.0, %v2187
    %v2189 = vrcp.pop %v2176
    %v2190 = vmul.f32 1.0, %v2189
    %2191 = vst [vmem:[#allocation10] sm:$0xff] %v2178
    %2192 = vst [vmem:[#allocation10 + $0x8] sm:$0xff] %v2180
    %2193 = vst [vmem:[#allocation10 + $0x10] sm:$0xff] %v2182
    %2194 = vst [vmem:[#allocation10 + $0x18] sm:$0xff] %v2184
    %2195 = vst [vmem:[#allocation10 + $0x20] sm:$0xff] %v2186
    %2196 = vst [vmem:[#allocation10 + $0x28] sm:$0xff] %v2188
    %2197 = vst [vmem:[#allocation10 + $0x30] sm:$0xff] %v2190
    // Predicated region
    $region38: #{_generator_forward_padded.1} parent=1 // pred_check
      _
    $region39: #{_generator_forward_padded.1} parent=1 // pred_check_branch
      %2199 = sbr.rel (0) target = $region41
    $region40: #{_generator_forward_padded.1} parent=1 // pred_region
      %s2201 = ssub.s32 896, 896
      %2202 = vsyncadd [#allocation4], %s2201
      %s2204 = sshll.u32 [#allocation10], 4
      %s2205 = int_to_ptr.vmem [resolvable:$true] %s2204
      %2207 = dma.vmem_to_hbm [thread:$0]  %s2205, 896, %s5, [#allocation4]
    $region41: #{_generator_forward_padded.1} parent=1 // pred_fallthru
      _
    // Predicated region
    $region42: #{_generator_forward_padded.1} parent=1 // pred_check
      _
    $region43: #{_generator_forward_padded.1} parent=1 // pred_check_branch
      %2209 = sbr.rel (0) target = $region45
    $region44: #{_generator_forward_padded.1} parent=1 // pred_region
      %2210 = dma.done [#allocation4], 896
    $region45: #{_generator_forward_padded.1} parent=1 // pred_fallthru
      _
    %2211 = vsyncpa [#allocation3], 1
    %2212 = vsyncpa [#allocation6], 1
    %2213 = vsyncpa [#allocation9], 1
    %2214 = vsyncpa [#allocation4], 1

</llo_original>
